<compile_context>
chip_gen: v7x
topology: tpu7x:2x2x1
jax: 0.10.0
libtpu: 0.0.40
codegen_flags: <defaults>
</compile_context>

<pallas_src>
import functools

import jax
import jax.numpy as jnp
from jax.experimental import pallas as pl
from jax.experimental.pallas import tpu as pltpu

LN_EPS = 1e-5  # torch.nn.LayerNorm default


# ----------------------------- kernel math ---------------------------------

def _silu(h):
    # silu(h) = h * sigmoid(h) = 0.5*h*(1 + tanh(0.5*h)); tanh runs on the EUP
    # slot instead of a full-tile f32 divide on the VPU.
    return 0.5 * h * (1.0 + jnp.tanh(0.5 * h))


def _layernorm(h, gamma, beta):
    # Single-pass LayerNorm: two independent reductions (sum, sum-of-squares),
    # then var = E[h^2] - mean^2.  One centered subtract instead of two.
    inv_n = 1.0 / h.shape[-1]
    mu = jnp.sum(h, axis=-1, keepdims=True) * inv_n
    ex2 = jnp.sum(h * h, axis=-1, keepdims=True) * inv_n
    var = jnp.maximum(ex2 - mu * mu, 0.0)  # guard tiny negatives from cancellation
    return (h - mu) * jax.lax.rsqrt(var + LN_EPS) * gamma + beta


def resblock_kernel(x_ref, w1_ref, w2_ref, p_ref, o_ref):
    x_in = x_ref[...]                                  # (tb, dim) activation dtype
    # Exactly one widening cast for the LN/residual path; the first dot eats the
    # raw load (no redundant cast when dtypes already match).
    x32 = x_in if x_in.dtype == jnp.float32 else x_in.astype(jnp.float32)
    x_mx = x_in if x_in.dtype == w1_ref.dtype else x_in.astype(w1_ref.dtype)

    p = p_ref[...]                                     # (8, dim) f32 stacked params
    b1, g1, be1, g2, be2 = (p[i:i + 1, :] for i in range(5))

    # fc1: x @ W1^T + b1   (w1_ref already holds W1^T, shape (dim, dim)).
    h = jnp.dot(x_mx, w1_ref[...], preferred_element_type=jnp.float32) + b1
    h = _silu(_layernorm(h, g1, be1))

    # fc2 (no bias): h @ W2^T
    h2 = jnp.dot(h.astype(w2_ref.dtype), w2_ref[...],
                 preferred_element_type=jnp.float32)

    # ln2, residual add, SiLU, single narrowing store.
    o_ref[...] = _silu(_layernorm(h2, g2, be2) + x32).astype(o_ref.dtype)


# --------------------------- capability probes ------------------------------

def _probe_copy_kernel(a_ref, o_ref):
    o_ref[...] = a_ref[...]


@functools.lru_cache(maxsize=1)
def _buffered_one_supported():
    """One-time probe: does this build accept pl.Buffered(1) on a grid-invariant
    input block?  (Probe mirrors the real usage: constant index_map, grid >= 2.)"""
    try:
        fn = pl.pallas_call(
            _probe_copy_kernel,
            out_shape=jax.ShapeDtypeStruct((16, 128), jnp.float32),
            grid=(2,),
            in_specs=[pl.BlockSpec((8, 128), lambda i: (0, 0),
                                   pipeline_mode=pl.Buffered(1))],
            out_specs=pl.BlockSpec((8, 128), lambda i: (i, 0)),
        )
        jax.block_until_ready(fn(jnp.zeros((8, 128), jnp.float32)))
        return True
    except Exception:  # narrow, trivial probe only -- the real call is never guarded
        return False


@functools.lru_cache(maxsize=1)
def _vmem_cap_bytes():
    """Usable scoped-VMEM budget: physical capacity minus ~25% headroom
    (v5e/v6e 128 MiB -> ~96 MiB, v7x 64 MiB -> ~48 MiB)."""
    try:
        cap = int(pltpu.get_tpu_info().vmem_capacity_bytes)
    except Exception:
        cap = 64 << 20            # conservative fallback that fits every generation
    return cap - cap // 4


# ----------------------------- tiling helpers -------------------------------

def _pick_tile_b(B, dim, act_bytes, io_budget_bytes, *, max_rows=2048, min_steps=2):
    """VMEM-budget-driven batch tile: the largest multiple-of-8 divisor of B
    that (a) fits the activation/temp budget, (b) stays <= max_rows, and
    (c) keeps the grid >= min_steps so v7x can shard the batch over 2 cores."""
    # Bytes per tile row: double-buffered in + out activation tiles + f32 temps.
    per_row = dim * (4 * act_bytes + 6 * 4)
    cap_rows = max(8, int(io_budget_bytes // max(per_row, 1)))
    cap_rows = min(cap_rows, max_rows, max(8, B // min_steps))
    if B % 8 != 0:
        return B                  # tiny/odd batch: single whole-batch block
    best = 0
    t = 8
    while t <= min(B, cap_rows):
        if B % t == 0:
            best = t
        t += 8
    return best if best > 0 else min(B, 8)


def _vmem_limit_bytes(tile_b, dim, act_bytes, w_bytes, n_weight_bufs, cap):
    weights = n_weight_bufs * (2 * dim * dim * w_bytes + 8 * dim * 4)
    io = 2 * 2 * tile_b * dim * act_bytes          # double-buffered x / out tiles
    temps = 6 * tile_b * dim * 4                   # in-kernel f32 intermediates
    total = weights + io + temps + (4 << 20)       # + Mosaic internal margin
    return int(min(cap, max(total, 16 << 20)))


# ------------------------------- host wrapper -------------------------------

def prepare_params(params, matmul_dtype=jnp.bfloat16):
    """One-time parameter prep: pre-transpose weights (stored (in, out)), cast
    them to the MXU feed dtype, and stack the five per-feature vectors into a
    single (8, dim) block (one DMA descriptor instead of five)."""
    dim = params["fc1_w"].shape[0]
    w1_t = jnp.asarray(params["fc1_w"].T, dtype=matmul_dtype)
    w2_t = jnp.asarray(params["fc2_w"].T, dtype=matmul_dtype)
    pvec = jnp.zeros((8, dim), jnp.float32)
    pvec = pvec.at[0].set(params["fc1_b"])
    pvec = pvec.at[1].set(params["ln1_g"])
    pvec = pvec.at[2].set(params["ln1_b"])
    pvec = pvec.at[3].set(params["ln2_g"])
    pvec = pvec.at[4].set(params["ln2_b"])
    return {"w1_t": w1_t, "w2_t": w2_t, "pvec": pvec}


def resblock_forward(x, prep, *, tile_b=None, activation_dtype=jnp.bfloat16):
    """x: (B, dim).  prep: output of prepare_params().  Returns activation_dtype."""
    B, dim = x.shape
    w1_t, w2_t, pvec = prep["w1_t"], prep["w2_t"], prep["pvec"]
    act_dtype = jnp.dtype(activation_dtype)
    x_act = x if x.dtype == act_dtype else x.astype(act_dtype)

    use_single_buf = _buffered_one_supported()
    n_wbufs = 1 if use_single_buf else 2
    cap = _vmem_cap_bytes()
    w_bytes = jnp.dtype(w1_t.dtype).itemsize
    weight_res = n_wbufs * (2 * dim * dim * w_bytes + 8 * dim * 4)
    # TODO(synk): add a K-tiled "arbitrary" reduction axis (pl.when-gated f32 accumulator) once resident weights exceed the VMEM cap (v7x: ~dim>=3000 single-buffered, ~2000 double-buffered).
    if weight_res + (8 << 20) > cap:
        raise NotImplementedError(
            f"dim={dim}: resident weights ({weight_res >> 20} MiB) exceed the "
            f"VMEM budget ({cap >> 20} MiB); K-tiled path not implemented yet.")

    if tile_b is None:
        tile_b = _pick_tile_b(B, dim, act_dtype.itemsize,
                              cap - weight_res - (8 << 20))
    assert B % tile_b == 0, "batch must be divisible by the batch tile"

    vmem_limit = _vmem_limit_bytes(tile_b, dim, act_dtype.itemsize, w_bytes,
                                   n_wbufs, cap)

    # Grid-invariant parameter blocks: single-buffer them when supported (frees
    # 2*dim^2*w_bytes of VMEM for bigger batch tiles; HBM traffic is unchanged).
    param_mode = {"pipeline_mode": pl.Buffered(1)} if use_single_buf else {}
    w_spec = pl.BlockSpec((dim, dim), lambda i: (0, 0), **param_mode)
    p_spec = pl.BlockSpec((8, dim), lambda i: (0, 0), **param_mode)
    x_spec = pl.BlockSpec((tile_b, dim), lambda i: (i, 0))
    o_spec = pl.BlockSpec((tile_b, dim), lambda i: (i, 0))

    call = pl.pallas_call(
        resblock_kernel,
        out_shape=jax.ShapeDtypeStruct((B, dim), act_dtype),
        grid_spec=pltpu.PrefetchScalarGridSpec(
            num_scalar_prefetch=0,
            grid=(B // tile_b,),
            in_specs=[x_spec, w_spec, w_spec, p_spec],
            out_specs=o_spec,
        ),
        compiler_params=pltpu.CompilerParams(
            dimension_semantics=("parallel",),
            vmem_limit_bytes=vmem_limit,
        ),
    )
    return call(x_act, w1_t, w2_t, pvec)


# ------------------------------- references ---------------------------------

def init_params(key, dim):
    """Deterministic init mirroring the module's __init__ shapes/defaults."""
    k1, k2 = jax.random.split(key, 2)
    bound = 1.0 / jnp.sqrt(dim)
    return {
        # nn.Linear(dim, dim): weight (dim, dim), bias (dim,)
        "fc1_w": jax.random.uniform(k1, (dim, dim), jnp.float32, -bound, bound),
        "fc1_b": jax.random.uniform(k2, (dim,), jnp.float32, -bound, bound),
        # nn.Linear(dim, dim, bias=False) with nn.init.zeros_
        "fc2_w": jnp.zeros((dim, dim), jnp.float32),
        # nn.LayerNorm defaults: weight=1, bias=0
        "ln1_g": jnp.ones((dim,), jnp.float32),
        "ln1_b": jnp.zeros((dim,), jnp.float32),
        "ln2_g": jnp.ones((dim,), jnp.float32),
        "ln2_b": jnp.zeros((dim,), jnp.float32),
    }


def _ln_ref(h, g, b):
    mu = jnp.mean(h, axis=-1, keepdims=True)
    var = jnp.mean((h - mu) ** 2, axis=-1, keepdims=True)
    return (h - mu) / jnp.sqrt(var + LN_EPS) * g + b


def _silu_ref(h):
    return h * jax.nn.sigmoid(h)


def resblock_reference(x, p):
    """Module-faithful pure-f32 reference (two-pass LN, sigmoid-form SiLU)."""
    h = x @ p["fc1_w"].T + p["fc1_b"]
    h = _silu_ref(_ln_ref(h, p["ln1_g"], p["ln1_b"]))
    h2 = h @ p["fc2_w"].T
    h2 = _ln_ref(h2, p["ln2_g"], p["ln2_b"])
    return _silu_ref(h2 + x)


def resblock_reference_matched(x, p, act_dtype=jnp.bfloat16, mm_dtype=jnp.bfloat16):
    """Reference matching the kernel's HBM/MXU dtypes (bf16 in/out, bf16 matmul
    operands, f32 accumulation and elementwise math) but using the textbook
    LN / SiLU formulas, so it independently validates the single-pass-LN and
    tanh-SiLU rewrites in the kernel."""
    xa = x.astype(act_dtype).astype(jnp.float32)
    h = jnp.dot(xa.astype(mm_dtype), p["fc1_w"].T.astype(mm_dtype),
                preferred_element_type=jnp.float32) + p["fc1_b"]
    h = _silu_ref(_ln_ref(h, p["ln1_g"], p["ln1_b"]))
    h2 = jnp.dot(h.astype(mm_dtype), p["fc2_w"].T.astype(mm_dtype),
                 preferred_element_type=jnp.float32)
    h2 = _ln_ref(h2, p["ln2_g"], p["ln2_b"])
    return _silu_ref(h2 + xa).astype(act_dtype)


# ----------------------------------- demo -----------------------------------

if __name__ == "__main__":
    # dim multiple of 128 (lane-dense stores / full MXU columns); B=512 tiles to
    # 2 grid steps of 256 rows (keeps >= 2 parallel steps for v7x core sharding).
    B, dim = 512, 128
    key = jax.random.PRNGKey(0)
    kx, kp, kw = jax.random.split(key, 3)
    x = jax.random.normal(kx, (B, dim), jnp.float32)

    # Check 1: module-faithful parameters (fc2 zero-init, LN defaults) against
    # the pure-f32 reference; tolerance reflects the bf16 HBM activations.
    params = init_params(kp, dim)
    y = resblock_forward(x, prepare_params(params))
    jax.block_until_ready(y)
    y_ref = resblock_reference(x, params)
    assert jnp.allclose(y.astype(jnp.float32), y_ref, atol=3e-2, rtol=3e-2), \
        "mismatch vs module-faithful f32 reference"

    # Check 2: randomized fc2 / LayerNorm params so the full datapath is
    # exercised (the module's zero-init makes fc2 a no-op at step 0), compared
    # against a dtype-matched reference for a tight check of the MXU path, the
    # single-pass LayerNorm and the tanh-form SiLU.
    k_fc2, k_g1, k_b1, k_g2, k_b2 = jax.random.split(kw, 5)
    bound = 1.0 / jnp.sqrt(dim)
    params_nz = dict(params)
    params_nz["fc2_w"] = jax.random.uniform(k_fc2, (dim, dim), jnp.float32,
                                            -bound, bound)
    params_nz["ln1_g"] = 1.0 + 0.2 * jax.random.normal(k_g1, (dim,), jnp.float32)
    params_nz["ln1_b"] = 0.1 * jax.random.normal(k_b1, (dim,), jnp.float32)
    params_nz["ln2_g"] = 1.0 + 0.2 * jax.random.normal(k_g2, (dim,), jnp.float32)
    params_nz["ln2_b"] = 0.1 * jax.random.normal(k_b2, (dim,), jnp.float32)

    y_nz = resblock_forward(x, prepare_params(params_nz))
    jax.block_until_ready(y_nz)
    y_nz_ref = resblock_reference_matched(x, params_nz)
    assert jnp.allclose(y_nz.astype(jnp.float32), y_nz_ref.astype(jnp.float32),
                        atol=1e-2, rtol=2e-2), \
        "mismatch vs dtype-matched reference"

    print("KERNEL_OK")
</pallas_src>

<mosaic_0001>
module attributes {stable_mosaic.version = 11 : i64} {
  func.func @_probe_copy_kernel(%arg0: i32, %arg1: memref<8x128xf32, #tpu.memory_space<vmem>>, %arg2: memref<8x128xf32, #tpu.memory_space<vmem>>) attributes {dimension_semantics = [#tpu.dimension_semantics<arbitrary>], iteration_bounds = array<i64: 2>, scalar_prefetch = 0 : i64, scratch_operands = 0 : i64, tpu.core_type = #tpu.core_type<tc>, window_params = [{pipeline_mode = #tpu.pipeline_mode<synchronous>, transform_indices = @transform_0, window_bounds = array<i64: 8, 128>}, {transform_indices = @transform_1, window_bounds = array<i64: 8, 128>}]} {
    %c0 = arith.constant 0 : index
    %c0_0 = arith.constant 0 : index
    %0 = vector.load %arg1[%c0, %c0_0] : memref<8x128xf32, #tpu.memory_space<vmem>>, vector<8x128xf32>
    %c0_1 = arith.constant 0 : index
    %c0_2 = arith.constant 0 : index
    %1 = vector.load %arg2[%c0_1, %c0_2] : memref<8x128xf32, #tpu.memory_space<vmem>>, vector<8x128xf32>
    tpu.vector_store %arg2[%c0_1, %c0_2], %0 {strides = array<i32>} : memref<8x128xf32, #tpu.memory_space<vmem>>, vector<8x128xf32>,
    return
  }
  func.func @transform_0(%arg0: i32) -> (i32, i32) {
    %c0_i32 = arith.constant 0 : i32
    %c0_i32_0 = arith.constant 0 : i32
    %c0_i32_1 = arith.constant 0 : i32
    return %c0_i32, %c0_i32_0 : i32, i32
  }
  func.func @transform_1(%arg0: i32) -> (i32, i32) {
    %c0_i32 = arith.constant 0 : i32
    %c0_i32_0 = arith.constant 0 : i32
    return %arg0, %c0_i32 : i32, i32
  }
}

module attributes {stable_mosaic.version = 11 : i64} {
  func.func @resblock_kernel(%arg0: i32, %arg1: memref<256x128xbf16, #tpu.memory_space<vmem>>, %arg2: memref<128x128xbf16, #tpu.memory_space<vmem>>, %arg3: memref<128x128xbf16, #tpu.memory_space<vmem>>, %arg4: memref<8x128xf32, #tpu.memory_space<vmem>>, %arg5: memref<256x128xbf16, #tpu.memory_space<vmem>>) attributes {dimension_semantics = [#tpu.dimension_semantics<parallel>], iteration_bounds = array<i64: 2>, scalar_prefetch = 0 : i64, scratch_operands = 0 : i64, tpu.core_type = #tpu.core_type<tc>, window_params = [{transform_indices = @transform_0, window_bounds = array<i64: 256, 128>}, {pipeline_mode = #tpu.pipeline_mode<synchronous>, transform_indices = @transform_1, window_bounds = array<i64: 128, 128>}, {pipeline_mode = #tpu.pipeline_mode<synchronous>, transform_indices = @transform_2, window_bounds = array<i64: 128, 128>}, {pipeline_mode = #tpu.pipeline_mode<synchronous>, transform_indices = @transform_3, window_bounds = array<i64: 8, 128>}, {transform_indices = @transform_4, window_bounds = array<i64: 256, 128>}]} {
    %c0 = arith.constant 0 : index
    %c0_0 = arith.constant 0 : index
    %0 = vector.load %arg1[%c0, %c0_0] : memref<256x128xbf16, #tpu.memory_space<vmem>>, vector<256x128xbf16>
    %1 = arith.extf %0 : vector<256x128xbf16> to vector<256x128xf32>
    %c0_1 = arith.constant 0 : index
    %c0_2 = arith.constant 0 : index
    %2 = vector.load %arg4[%c0_1, %c0_2] : memref<8x128xf32, #tpu.memory_space<vmem>>, vector<8x128xf32>
    %3 = vector.extract_strided_slice %2 {offsets = [0, 0], sizes = [1, 128], strides = [1, 1]} : vector<8x128xf32> to vector<1x128xf32>
    %4 = vector.extract_strided_slice %2 {offsets = [1, 0], sizes = [1, 128], strides = [1, 1]} : vector<8x128xf32> to vector<1x128xf32>
    %5 = vector.extract_strided_slice %2 {offsets = [2, 0], sizes = [1, 128], strides = [1, 1]} : vector<8x128xf32> to vector<1x128xf32>
    %6 = vector.extract_strided_slice %2 {offsets = [3, 0], sizes = [1, 128], strides = [1, 1]} : vector<8x128xf32> to vector<1x128xf32>
    %7 = vector.extract_strided_slice %2 {offsets = [4, 0], sizes = [1, 128], strides = [1, 1]} : vector<8x128xf32> to vector<1x128xf32>
    %c0_3 = arith.constant 0 : index
    %c0_4 = arith.constant 0 : index
    %8 = vector.load %arg2[%c0_3, %c0_4] : memref<128x128xbf16, #tpu.memory_space<vmem>>, vector<128x128xbf16>
    %cst = arith.constant dense<0.000000e+00> : vector<256x128xf32>
    %9 = tpu.matmul %0, %8, %cst {dimension_numbers = #tpu.dot_dimension_numbers<[1], [0], [0], [1], [0, 0, 1, 1], [], []>} : vector<256x128xbf16>, vector<128x128xbf16>, vector<256x128xf32> -> vector<256x128xf32>
    %10 = vector.broadcast %3 : vector<1x128xf32> to vector<256x128xf32>
    %11 = arith.addf %9, %10 : vector<256x128xf32>
    %cst_5 = arith.constant dense<0.000000e+00> : vector<256xf32>
    %12 = vector.multi_reduction <add>, %11, %cst_5 [1] : vector<256x128xf32> to vector<256xf32>
    %13 = vector.shape_cast %12 : vector<256xf32> to vector<256x1xf32>
    %cst_6 = arith.constant 7.812500e-03 : f32
    %14 = vector.broadcast %cst_6 : f32 to vector<256x1xf32>
    %15 = arith.mulf %13, %14 : vector<256x1xf32>
    %16 = arith.mulf %11, %11 : vector<256x128xf32>
    %cst_7 = arith.constant dense<0.000000e+00> : vector<256xf32>
    %17 = vector.multi_reduction <add>, %16, %cst_7 [1] : vector<256x128xf32> to vector<256xf32>
    %18 = vector.shape_cast %17 : vector<256xf32> to vector<256x1xf32>
    %cst_8 = arith.constant 7.812500e-03 : f32
    %19 = vector.broadcast %cst_8 : f32 to vector<256x1xf32>
    %20 = arith.mulf %18, %19 : vector<256x1xf32>
    %21 = arith.mulf %15, %15 : vector<256x1xf32>
    %22 = arith.subf %20, %21 : vector<256x1xf32>
    %cst_9 = arith.constant 0.000000e+00 : f32
    %23 = vector.broadcast %cst_9 : f32 to vector<256x1xf32>
    %24 = arith.maximumf %22, %23 : vector<256x1xf32>
    %25 = vector.broadcast %15 : vector<256x1xf32> to vector<256x128xf32>
    %26 = arith.subf %11, %25 : vector<256x128xf32>
    %cst_10 = arith.constant 9.99999974E-6 : f32
    %27 = vector.broadcast %cst_10 : f32 to vector<256x1xf32>
    %28 = arith.addf %24, %27 : vector<256x1xf32>
    %29 = math.rsqrt %28 : vector<256x1xf32>
    %30 = vector.broadcast %29 : vector<256x1xf32> to vector<256x128xf32>
    %31 = arith.mulf %26, %30 : vector<256x128xf32>
    %32 = vector.broadcast %4 : vector<1x128xf32> to vector<256x128xf32>
    %33 = arith.mulf %31, %32 : vector<256x128xf32>
    %34 = vector.broadcast %5 : vector<1x128xf32> to vector<256x128xf32>
    %35 = arith.addf %33, %34 : vector<256x128xf32>
    %cst_11 = arith.constant 5.000000e-01 : f32
    %36 = vector.broadcast %cst_11 : f32 to vector<256x128xf32>
    %37 = arith.mulf %36, %35 : vector<256x128xf32>
    %cst_12 = arith.constant 5.000000e-01 : f32
    %38 = vector.broadcast %cst_12 : f32 to vector<256x128xf32>
    %39 = arith.mulf %38, %35 : vector<256x128xf32>
    %40 = math.tanh %39 : vector<256x128xf32>
    %cst_13 = arith.constant 1.000000e+00 : f32
    %41 = vector.broadcast %cst_13 : f32 to vector<256x128xf32>
    %42 = arith.addf %41, %40 : vector<256x128xf32>
    %43 = arith.mulf %37, %42 : vector<256x128xf32>
    %44 = arith.truncf %43 : vector<256x128xf32> to vector<256x128xbf16>
    %c0_14 = arith.constant 0 : index
    %c0_15 = arith.constant 0 : index
    %45 = vector.load %arg3[%c0_14, %c0_15] : memref<128x128xbf16, #tpu.memory_space<vmem>>, vector<128x128xbf16>
    %cst_16 = arith.constant dense<0.000000e+00> : vector<256x128xf32>
    %46 = tpu.matmul %44, %45, %cst_16 {dimension_numbers = #tpu.dot_dimension_numbers<[1], [0], [0], [1], [0, 0, 1, 1], [], []>} : vector<256x128xbf16>, vector<128x128xbf16>, vector<256x128xf32> -> vector<256x128xf32>
    %cst_17 = arith.constant dense<0.000000e+00> : vector<256xf32>
    %47 = vector.multi_reduction <add>, %46, %cst_17 [1] : vector<256x128xf32> to vector<256xf32>
    %48 = vector.shape_cast %47 : vector<256xf32> to vector<256x1xf32>
    %cst_18 = arith.constant 7.812500e-03 : f32
    %49 = vector.broadcast %cst_18 : f32 to vector<256x1xf32>
    %50 = arith.mulf %48, %49 : vector<256x1xf32>
    %51 = arith.mulf %46, %46 : vector<256x128xf32>
    %cst_19 = arith.constant dense<0.000000e+00> : vector<256xf32>
    %52 = vector.multi_reduction <add>, %51, %cst_19 [1] : vector<256x128xf32> to vector<256xf32>
    %53 = vector.shape_cast %52 : vector<256xf32> to vector<256x1xf32>
    %cst_20 = arith.constant 7.812500e-03 : f32
    %54 = vector.broadcast %cst_20 : f32 to vector<256x1xf32>
    %55 = arith.mulf %53, %54 : vector<256x1xf32>
    %56 = arith.mulf %50, %50 : vector<256x1xf32>
    %57 = arith.subf %55, %56 : vector<256x1xf32>
    %cst_21 = arith.constant 0.000000e+00 : f32
    %58 = vector.broadcast %cst_21 : f32 to vector<256x1xf32>
    %59 = arith.maximumf %57, %58 : vector<256x1xf32>
    %60 = vector.broadcast %50 : vector<256x1xf32> to vector<256x128xf32>
    %61 = arith.subf %46, %60 : vector<256x128xf32>
    %cst_22 = arith.constant 9.99999974E-6 : f32
    %62 = vector.broadcast %cst_22 : f32 to vector<256x1xf32>
    %63 = arith.addf %59, %62 : vector<256x1xf32>
    %64 = math.rsqrt %63 : vector<256x1xf32>
    %65 = vector.broadcast %64 : vector<256x1xf32> to vector<256x128xf32>
    %66 = arith.mulf %61, %65 : vector<256x128xf32>
    %67 = vector.broadcast %6 : vector<1x128xf32> to vector<256x128xf32>
    %68 = arith.mulf %66, %67 : vector<256x128xf32>
    %69 = vector.broadcast %7 : vector<1x128xf32> to vector<256x128xf32>
    %70 = arith.addf %68, %69 : vector<256x128xf32>
    %71 = arith.addf %70, %1 : vector<256x128xf32>
    %cst_23 = arith.constant 5.000000e-01 : f32
    %72 = vector.broadcast %cst_23 : f32 to vector<256x128xf32>
    %73 = arith.mulf %72, %71 : vector<256x128xf32>
    %cst_24 = arith.constant 5.000000e-01 : f32
    %74 = vector.broadcast %cst_24 : f32 to vector<256x128xf32>
    %75 = arith.mulf %74, %71 : vector<256x128xf32>
    %76 = math.tanh %75 : vector<256x128xf32>
    %cst_25 = arith.constant 1.000000e+00 : f32
    %77 = vector.broadcast %cst_25 : f32 to vector<256x128xf32>
    %78 = arith.addf %77, %76 : vector<256x128xf32>
    %79 = arith.mulf %73, %78 : vector<256x128xf32>
    %80 = arith.truncf %79 : vector<256x128xf32> to vector<256x128xbf16>
    %c0_26 = arith.constant 0 : index
    %c0_27 = arith.constant 0 : index
    %81 = vector.load %arg5[%c0_26, %c0_27] : memref<256x128xbf16, #tpu.memory_space<vmem>>, vector<256x128xbf16>
    tpu.vector_store %arg5[%c0_26, %c0_27], %80 {strides = array<i32>} : memref<256x128xbf16, #tpu.memory_space<vmem>>, vector<256x128xbf16>,
    return
  }
  func.func @transform_0(%arg0: i32) -> (i32, i32) {
    %c0_i32 = arith.constant 0 : i32
    %c0_i32_0 = arith.constant 0 : i32
    return %arg0, %c0_i32 : i32, i32
  }
  func.func @transform_1(%arg0: i32) -> (i32, i32) {
    %c0_i32 = arith.constant 0 : i32
    %c0_i32_0 = arith.constant 0 : i32
    %c0_i32_1 = arith.constant 0 : i32
    return %c0_i32, %c0_i32_0 : i32, i32
  }
  func.func @transform_2(%arg0: i32) -> (i32, i32) {
    %c0_i32 = arith.constant 0 : i32
    %c0_i32_0 = arith.constant 0 : i32
    %c0_i32_1 = arith.constant 0 : i32
    return %c0_i32, %c0_i32_0 : i32, i32
  }
  func.func @transform_3(%arg0: i32) -> (i32, i32) {
    %c0_i32 = arith.constant 0 : i32
    %c0_i32_0 = arith.constant 0 : i32
    %c0_i32_1 = arith.constant 0 : i32
    return %c0_i32, %c0_i32_0 : i32, i32
  }
  func.func @transform_4(%arg0: i32) -> (i32, i32) {
    %c0_i32 = arith.constant 0 : i32
    %c0_i32_0 = arith.constant 0 : i32
    return %arg0, %c0_i32 : i32, i32
  }
}

</mosaic_0001>

<llo_original>
// kernel: tpu_custom_call.1
$region0: #{tpu_custom_call.1}
  #allocation0 [shape = 'u32[]', space=smem, size = 0x4, offset = 0x4, fixed_abs, tag = 'smem constant byte address 0x4 - core index']
  #allocation1 [shape = 'u32[144,128]{1,0:T(1,128)}', space=vmem, size = 0x12000, scoped, tag = 'internal scratch']
  %s0 = inlined_call_operand.hbm [shape: f32[8,128], index: 0, kind: input, shape index: {}]
  %s1 = inlined_call_operand.hbm [shape: f32[16,128], index: 1, kind: output, shape index: {}]
  %s2 = sld [smem:[#allocation0]]
  $region41: #{tpu_custom_call.1} parent=0
    _
  %s4 = ssub.s32 1, %s2
  %s5 = scalar_select 0, %s4, %s2
  $region1: #{tpu_custom_call.1} parent=0
    #allocation2 [shape = 'u8[4096]{0}', space=vmem, size = 0x1000, scoped, tag = 'input window, operand 0, single buffered']
    #allocation3 [shape = 's32[2]{0}', space=sflag, size = 0x8, scoped, tag = 'scoped memory for tpu_custom_call.1']
    #allocation4 [shape = 's32[2]{0}', space=sflag, size = 0x8, scoped, tag = 'scoped memory for tpu_custom_call.1']
    #allocation5 [shape = 'u8[8192]{0}', space=vmem, size = 0x2000, scoped, tag = 'output window, operand 0']
    %6 = vsyncpa [#allocation3], 0
    %7 = vsyncpa [#allocation4], 0
    %s8 = scalar_lea.sflag [#allocation4], 1
    %9 = vsyncpa %s8, 0
    loop: start=0, step=1, limit=4
    $region2: #{tpu_custom_call.1} parent=1 // loop_pre_header
      _
    $region3: #{tpu_custom_call.1} parent=1 // loop_header
      %s11 = sphi 0, %s15
      %p12 = scmp.ge.s32.totalorder %s11, 4
      %s19 = sphi 0, %s19
      %s21 = sphi 0, %s19
      %s22 = sphi 0, %s21
      %s36 = sphi 0, %s22
      %s42 = sphi 0, %s44
      %s45 = sphi 0, %s42
      %s46 = sphi 0, %s45
      %s62 = sphi 0, %s46
    $region4: #{tpu_custom_call.1} parent=1 // loop_header_branch
      %14 = sbr.rel (%p12) target = $region8
    $region5: #{tpu_custom_call.1} parent=1 // loop_body
      %s16 = ssub.s32 %s11, 1
      %s17 = ssub.s32 %s11, 2
      %s18 = sadd.s32 %s11, 1
      %s20 = sadd.s32 %s19, 1
      %p23 = scmp.eq.s32.totalorder %s11, 1
      %p24 = scmp.ne.s32.totalorder %s19, %s21
      %p25 = scmp.eq.s32.totalorder %s11, 0
      %p26 = por %p24, %p25
      %p27 = scmp.ne.s32.totalorder %s19, %s21
      %p28 = scmp.eq.s32.totalorder %s16, 1
      %p29 = por %p27, %p28
      %p30 = scmp.ne.s32.totalorder %s21, %s22
      %p31 = scmp.eq.s32.totalorder %s16, 0
      %p32 = por %p30, %p31
      %p33 = scmp.ne.s32.totalorder %s21, %s22
      %p34 = scmp.eq.s32.totalorder %s17, 1
      %p35 = por %p33, %p34
      %p37 = scmp.ne.s32.totalorder %s22, %s36
      %p38 = scmp.eq.s32.totalorder %s17, 0
      %p39 = por %p37, %p38
      %s40 = ssub.s32 %s11, %s18
      %p41 = scmp.eq.s32.totalorder %s40, 0
      %s43 = sadd.s32 %s42, 1
      %s44 = scalar_select %p41, %s42, %s43
      %p47 = pneg %p41
      %p48 = scmp.eq.s32.totalorder %s11, 1
      %p49 = por %p47, %p48
      %p50 = scmp.ne.s32.totalorder %s42, %s45
      %p51 = scmp.eq.s32.totalorder %s11, 0
      %p52 = por %p50, %p51
      %p53 = scmp.ne.s32.totalorder %s42, %s45
      %p54 = scmp.eq.s32.totalorder %s16, 1
      %p55 = por %p53, %p54
      %p56 = scmp.ne.s32.totalorder %s45, %s46
      %p57 = scmp.eq.s32.totalorder %s16, 0
      %p58 = por %p56, %p57
      %p59 = scmp.ne.s32.totalorder %s45, %s46
      %p60 = scmp.eq.s32.totalorder %s17, 1
      %p61 = por %p59, %p60
      %p63 = scmp.ne.s32.totalorder %s46, %s62
      %p64 = scmp.eq.s32.totalorder %s17, 0
      %p65 = por %p63, %p64
      %p66 = scmp.le.s32.totalorder 1, %s11
      %p67 = scmp.lt.s32.totalorder %s11, 3
      %p68 = pnand %p66, %p67
      %p69 = pneg %p68
      // Predicated region
      $region9: #{tpu_custom_call.1} parent=5 // pred_check
        _
      $region10: #{tpu_custom_call.1} parent=5 // pred_check_branch
        %71 = sbr.rel (%p68) target = $region12
      $region11: #{tpu_custom_call.1} parent=5 // pred_region
        %s72 = ssub.s32 %s11, 1
        // Predicated region
        $region13: #{tpu_custom_call.1} parent=11 // pred_check
          %p73 = pneg %p32
        $region14: #{tpu_custom_call.1} parent=11 // pred_check_branch
          %75 = sbr.rel (%p73) target = $region16
        $region15: #{tpu_custom_call.1} parent=11 // pred_region
          %s77 = ssub.s32 128, 128
          %78 = vsyncadd [#allocation3], %s77
          %s80 = sshll.u32 [#allocation2], 4
          %s81 = int_to_ptr.vmem [resolvable:$true] %s80
          %83 = dma.hbm_to_vmem [thread:$0]  %s0, 128, %s81, [#allocation3]
        $region16: #{tpu_custom_call.1} parent=11 // pred_fallthru
          _
      $region12: #{tpu_custom_call.1} parent=5 // pred_fallthru
        _
      %p84 = scmp.lt.s32.totalorder %s11, 2
      // Predicated region
      $region17: #{tpu_custom_call.1} parent=5 // pred_check
        %p85 = pneg %p84
      $region18: #{tpu_custom_call.1} parent=5 // pred_check_branch
        %87 = sbr.rel (%p85) target = $region20
      $region19: #{tpu_custom_call.1} parent=5 // pred_region
        _
      $region20: #{tpu_custom_call.1} parent=5 // pred_fallthru
        _
      %p88 = scmp.le.s32.totalorder 1, %s11
      %p89 = scmp.lt.s32.totalorder %s11, 3
      %p90 = pnand %p88, %p89
      %p91 = pneg %p90
      // Predicated region
      $region21: #{tpu_custom_call.1} parent=5 // pred_check
        _
      $region22: #{tpu_custom_call.1} parent=5 // pred_check_branch
        %93 = sbr.rel (%p90) target = $region24
      $region23: #{tpu_custom_call.1} parent=5 // pred_region
        %s94 = ssub.s32 %s11, 1
        // Predicated region
        $region25: #{tpu_custom_call.1} parent=23 // pred_check
          %p95 = pneg %p32
        $region26: #{tpu_custom_call.1} parent=23 // pred_check_branch
          %97 = sbr.rel (%p95) target = $region28
        $region27: #{tpu_custom_call.1} parent=23 // pred_region
          %98 = dma.done [#allocation3], 128
        $region28: #{tpu_custom_call.1} parent=23 // pred_fallthru
          _
        %p99 = pneg %p32
        %p100 = pneg %p29
        %p101 = pneg %p58
        %p102 = pneg %p55
        %s103 = sand.u32 %s45, 1
        %s104 = scalar_lea.sflag [#allocation4], %s103
        %s105 = sand.u32 %s45, 1
        %s106 = smul.addr %s105, 8
        %s107 = scalar_lea.vmem [#allocation5], %s106
        %v108 = vld [vmem:[#allocation2] sm:$0xff]
        %109 = vst [vmem:[%s107] sm:$0xff] %v108
        %s110 = sand.u32 %s45, 1
        %s111 = scalar_lea.sflag [#allocation4], %s110
        %s112 = sand.u32 %s45, 1
        %s113 = smul.addr %s112, 8
        %s114 = scalar_lea.vmem [#allocation5], %s113
        // Predicated region
        $region29: #{tpu_custom_call.1} parent=23 // pred_check
          %p115 = pneg %p55
        $region30: #{tpu_custom_call.1} parent=23 // pred_check_branch
          %117 = sbr.rel (%p115) target = $region32
        $region31: #{tpu_custom_call.1} parent=23 // pred_region
          %s119 = ssub.s32 128, 128
          %120 = vsyncadd %s111, %s119
          %s121 = smul.addr %s16, 128
          %s122 = scalar_lea.hbm %s1, %s121
          %s124 = sshll.u32 %s114, 4
          %s125 = int_to_ptr.vmem [resolvable:$true] %s124
          %127 = dma.vmem_to_hbm [thread:$0]  %s125, 128, %s122, %s111
        $region32: #{tpu_custom_call.1} parent=23 // pred_fallthru
          _
      $region24: #{tpu_custom_call.1} parent=5 // pred_fallthru
        _
      %p128 = scmp.le.s32.totalorder 2, %s11
      // Predicated region
      $region33: #{tpu_custom_call.1} parent=5 // pred_check
        %p129 = pneg %p128
      $region34: #{tpu_custom_call.1} parent=5 // pred_check_branch
        %131 = sbr.rel (%p129) target = $region36
      $region35: #{tpu_custom_call.1} parent=5 // pred_region
        %s132 = ssub.s32 %s11, 2
        // Predicated region
        $region37: #{tpu_custom_call.1} parent=35 // pred_check
          %p133 = pneg %p61
        $region38: #{tpu_custom_call.1} parent=35 // pred_check_branch
          %135 = sbr.rel (%p133) target = $region40
        $region39: #{tpu_custom_call.1} parent=35 // pred_region
          %s136 = sand.u32 %s46, 1
          %s137 = scalar_lea.sflag [#allocation4], %s136
          %s138 = sand.u32 %s46, 1
          %s139 = smul.addr %s138, 8
          %s140 = scalar_lea.vmem [#allocation5], %s139
          %141 = dma.done %s137, 128
        $region40: #{tpu_custom_call.1} parent=35 // pred_fallthru
          _
      $region36: #{tpu_custom_call.1} parent=5 // pred_fallthru
        _
    $region6: #{tpu_custom_call.1} parent=1 // loop_footer
      %s15 = sadd.s32 1, %s11
    $region7: #{tpu_custom_call.1} parent=1 // loop_footer_branch
      %10 = sbr.rel target = $region3
    $region8: #{tpu_custom_call.1} parent=1 // loop_exit
      _
    %142 = vsyncpa [#allocation3], 1
    %s143 = scalar_lea.sflag [#allocation3], 1
    %144 = vsyncpa %s143, 1
    %145 = vsyncpa [#allocation4], 1
    %s146 = scalar_lea.sflag [#allocation4], 1
    %147 = vsyncpa %s146, 1

// kernel: tpu_custom_call.1
$region0: #{tpu_custom_call.1}
  #allocation0 [shape = 'u32[]', space=smem, size = 0x4, offset = 0x4, fixed_abs, tag = 'smem constant byte address 0x4 - core index']
  #allocation1 [shape = 'u32[144,128]{1,0:T(1,128)}', space=vmem, size = 0x12000, scoped, tag = 'internal scratch']
  %s0 = inlined_call_operand.hbm [shape: bf16[512,128], index: 0, kind: input, shape index: {}]
  %s1 = inlined_call_operand.hbm [shape: bf16[128,128], index: 1, kind: input, shape index: {}]
  %s2 = inlined_call_operand.hbm [shape: bf16[128,128], index: 2, kind: input, shape index: {}]
  %s3 = inlined_call_operand.vmem [shape: f32[8,128], index: 3, kind: input, shape index: {}]
  %s4 = inlined_call_operand.hbm [shape: bf16[512,128], index: 4, kind: output, shape index: {}]
  %s5 = sld [smem:[#allocation0]]
  $region61: #{tpu_custom_call.1} parent=0
    _
  %s7 = ssub.s32 1, %s5
  %s8 = scalar_select 0, %s7, %s5
  $region1: #{tpu_custom_call.1} parent=0
    #allocation2 [shape = 'u8[131072]{0}', space=vmem, size = 0x20000, scoped, tag = 'input window, operand 0']
    #allocation3 [shape = 's32[2]{0}', space=sflag, size = 0x8, scoped, tag = 'scoped memory for tpu_custom_call.1']
    #allocation4 [shape = 's32[2]{0}', space=sflag, size = 0x8, scoped, tag = 'scoped memory for tpu_custom_call.1']
    #allocation5 [shape = 'u8[32768]{0}', space=vmem, size = 0x8000, scoped, tag = 'input window, operand 1, single buffered']
    #allocation6 [shape = 's32[1]{0}', space=sflag, size = 0x4, scoped, tag = 'scoped memory for tpu_custom_call.1']
    #allocation7 [shape = 'u8[32768]{0}', space=vmem, size = 0x8000, scoped, tag = 'input window, operand 2, single buffered']
    #allocation8 [shape = 'u8[131072]{0}', space=vmem, size = 0x20000, scoped, tag = 'output window, operand 0']
    %9 = vsyncpa [#allocation3], 0
    %s10 = scalar_lea.sflag [#allocation3], 1
    %11 = vsyncpa %s10, 0
    %12 = vsyncpa [#allocation6], 0
    %13 = vsyncpa [#allocation4], 0
    %s14 = scalar_lea.sflag [#allocation4], 1
    %15 = vsyncpa %s14, 0
    loop: start=0, step=1, limit=4
    $region2: #{tpu_custom_call.1} parent=1 // loop_pre_header
      _
    $region3: #{tpu_custom_call.1} parent=1 // loop_header
      %s17 = sphi 0, %s21
      %p18 = scmp.ge.s32.totalorder %s17, 4
      %s27 = sphi 0, %s29
      %s30 = sphi 0, %s27
      %s31 = sphi 0, %s30
      %s47 = sphi 0, %s31
      %s51 = sphi 0, %s51
      %s53 = sphi 0, %s51
      %s54 = sphi 0, %s53
      %s68 = sphi 0, %s54
      %s72 = sphi 0, %s72
      %s74 = sphi 0, %s72
      %s75 = sphi 0, %s74
      %s89 = sphi 0, %s75
      %s93 = sphi 0, %s93
      %s95 = sphi 0, %s93
      %s96 = sphi 0, %s95
      %s110 = sphi 0, %s96
      %s116 = sphi 0, %s118
      %s119 = sphi 0, %s116
      %s120 = sphi 0, %s119
      %s136 = sphi 0, %s120
    $region4: #{tpu_custom_call.1} parent=1 // loop_header_branch
      %20 = sbr.rel (%p18) target = $region8
    $region5: #{tpu_custom_call.1} parent=1 // loop_body
      %s22 = ssub.s32 %s17, 1
      %s23 = ssub.s32 %s17, 2
      %s24 = sadd.s32 %s17, 1
      %s25 = ssub.s32 %s17, %s24
      %p26 = scmp.eq.s32.totalorder %s25, 0
      %s28 = sadd.s32 %s27, 1
      %s29 = scalar_select %p26, %s27, %s28
      %p32 = pneg %p26
      %p33 = scmp.eq.s32.totalorder %s17, 1
      %p34 = por %p32, %p33
      %p35 = scmp.ne.s32.totalorder %s27, %s30
      %p36 = scmp.eq.s32.totalorder %s17, 0
      %p37 = por %p35, %p36
      %p38 = scmp.ne.s32.totalorder %s27, %s30
      %p39 = scmp.eq.s32.totalorder %s22, 1
      %p40 = por %p38, %p39
      %p41 = scmp.ne.s32.totalorder %s30, %s31
      %p42 = scmp.eq.s32.totalorder %s22, 0
      %p43 = por %p41, %p42
      %p44 = scmp.ne.s32.totalorder %s30, %s31
      %p45 = scmp.eq.s32.totalorder %s23, 1
      %p46 = por %p44, %p45
      %p48 = scmp.ne.s32.totalorder %s31, %s47
      %p49 = scmp.eq.s32.totalorder %s23, 0
      %p50 = por %p48, %p49
      %s52 = sadd.s32 %s51, 1
      %p55 = scmp.eq.s32.totalorder %s17, 1
      %p56 = scmp.ne.s32.totalorder %s51, %s53
      %p57 = scmp.eq.s32.totalorder %s17, 0
      %p58 = por %p56, %p57
      %p59 = scmp.ne.s32.totalorder %s51, %s53
      %p60 = scmp.eq.s32.totalorder %s22, 1
      %p61 = por %p59, %p60
      %p62 = scmp.ne.s32.totalorder %s53, %s54
      %p63 = scmp.eq.s32.totalorder %s22, 0
      %p64 = por %p62, %p63
      %p65 = scmp.ne.s32.totalorder %s53, %s54
      %p66 = scmp.eq.s32.totalorder %s23, 1
      %p67 = por %p65, %p66
      %p69 = scmp.ne.s32.totalorder %s54, %s68
      %p70 = scmp.eq.s32.totalorder %s23, 0
      %p71 = por %p69, %p70
      %s73 = sadd.s32 %s72, 1
      %p76 = scmp.eq.s32.totalorder %s17, 1
      %p77 = scmp.ne.s32.totalorder %s72, %s74
      %p78 = scmp.eq.s32.totalorder %s17, 0
      %p79 = por %p77, %p78
      %p80 = scmp.ne.s32.totalorder %s72, %s74
      %p81 = scmp.eq.s32.totalorder %s22, 1
      %p82 = por %p80, %p81
      %p83 = scmp.ne.s32.totalorder %s74, %s75
      %p84 = scmp.eq.s32.totalorder %s22, 0
      %p85 = por %p83, %p84
      %p86 = scmp.ne.s32.totalorder %s74, %s75
      %p87 = scmp.eq.s32.totalorder %s23, 1
      %p88 = por %p86, %p87
      %p90 = scmp.ne.s32.totalorder %s75, %s89
      %p91 = scmp.eq.s32.totalorder %s23, 0
      %p92 = por %p90, %p91
      %s94 = sadd.s32 %s93, 1
      %p97 = scmp.eq.s32.totalorder %s17, 1
      %p98 = scmp.ne.s32.totalorder %s93, %s95
      %p99 = scmp.eq.s32.totalorder %s17, 0
      %p100 = por %p98, %p99
      %p101 = scmp.ne.s32.totalorder %s93, %s95
      %p102 = scmp.eq.s32.totalorder %s22, 1
      %p103 = por %p101, %p102
      %p104 = scmp.ne.s32.totalorder %s95, %s96
      %p105 = scmp.eq.s32.totalorder %s22, 0
      %p106 = por %p104, %p105
      %p107 = scmp.ne.s32.totalorder %s95, %s96
      %p108 = scmp.eq.s32.totalorder %s23, 1
      %p109 = por %p107, %p108
      %p111 = scmp.ne.s32.totalorder %s96, %s110
      %p112 = scmp.eq.s32.totalorder %s23, 0
      %p113 = por %p111, %p112
      %s114 = ssub.s32 %s17, %s24
      %p115 = scmp.eq.s32.totalorder %s114, 0
      %s117 = sadd.s32 %s116, 1
      %s118 = scalar_select %p115, %s116, %s117
      %p121 = pneg %p115
      %p122 = scmp.eq.s32.totalorder %s17, 1
      %p123 = por %p121, %p122
      %p124 = scmp.ne.s32.totalorder %s116, %s119
      %p125 = scmp.eq.s32.totalorder %s17, 0
      %p126 = por %p124, %p125
      %p127 = scmp.ne.s32.totalorder %s116, %s119
      %p128 = scmp.eq.s32.totalorder %s22, 1
      %p129 = por %p127, %p128
      %p130 = scmp.ne.s32.totalorder %s119, %s120
      %p131 = scmp.eq.s32.totalorder %s22, 0
      %p132 = por %p130, %p131
      %p133 = scmp.ne.s32.totalorder %s119, %s120
      %p134 = scmp.eq.s32.totalorder %s23, 1
      %p135 = por %p133, %p134
      %p137 = scmp.ne.s32.totalorder %s120, %s136
      %p138 = scmp.eq.s32.totalorder %s23, 0
      %p139 = por %p137, %p138
      %p140 = scmp.le.s32.totalorder 1, %s17
      %p141 = scmp.lt.s32.totalorder %s17, 3
      %p142 = pnand %p140, %p141
      %p143 = pneg %p142
      // Predicated region
      $region9: #{tpu_custom_call.1} parent=5 // pred_check
        _
      $region10: #{tpu_custom_call.1} parent=5 // pred_check_branch
        %145 = sbr.rel (%p142) target = $region12
      $region11: #{tpu_custom_call.1} parent=5 // pred_region
        %s146 = ssub.s32 %s17, 1
        // Predicated region
        $region13: #{tpu_custom_call.1} parent=11 // pred_check
          %p147 = pneg %p64
        $region14: #{tpu_custom_call.1} parent=11 // pred_check_branch
          %149 = sbr.rel (%p147) target = $region16
        $region15: #{tpu_custom_call.1} parent=11 // pred_region
          %s151 = ssub.s32 1024, 1024
          %152 = vsyncadd [#allocation6], %s151
          %s153 = sshll.u32 [#allocation5], 4
          %s154 = int_to_ptr.vmem [resolvable:$true] %s153
          %159 = dma.hbm_to_vmem [thread:$0]  %s1, 1024, %s154, [#allocation6], 64, 64, 4
        $region16: #{tpu_custom_call.1} parent=11 // pred_fallthru
          _
        // Predicated region
        $region17: #{tpu_custom_call.1} parent=11 // pred_check
          %p160 = pneg %p85
        $region18: #{tpu_custom_call.1} parent=11 // pred_check_branch
          %162 = sbr.rel (%p160) target = $region20
        $region19: #{tpu_custom_call.1} parent=11 // pred_region
          %s164 = ssub.s32 1024, 1024
          %165 = vsyncadd [#allocation6], %s164
          %s166 = sshll.u32 [#allocation7], 4
          %s167 = int_to_ptr.vmem [resolvable:$true] %s166
          %172 = dma.hbm_to_vmem [thread:$0]  %s2, 1024, %s167, [#allocation6], 64, 64, 4
        $region20: #{tpu_custom_call.1} parent=11 // pred_fallthru
          _
        // Predicated region
        $region21: #{tpu_custom_call.1} parent=11 // pred_check
          %p173 = pneg %p106
        $region22: #{tpu_custom_call.1} parent=11 // pred_check_branch
          %175 = sbr.rel (%p173) target = $region24
        $region23: #{tpu_custom_call.1} parent=11 // pred_region
          _
        $region24: #{tpu_custom_call.1} parent=11 // pred_fallthru
          _
      $region12: #{tpu_custom_call.1} parent=5 // pred_fallthru
        _
      %p176 = scmp.lt.s32.totalorder %s17, 2
      // Predicated region
      $region25: #{tpu_custom_call.1} parent=5 // pred_check
        %p177 = pneg %p176
      $region26: #{tpu_custom_call.1} parent=5 // pred_check_branch
        %179 = sbr.rel (%p177) target = $region28
      $region27: #{tpu_custom_call.1} parent=5 // pred_region
        // Predicated region
        $region29: #{tpu_custom_call.1} parent=27 // pred_check
          %p180 = pneg %p37
        $region30: #{tpu_custom_call.1} parent=27 // pred_check_branch
          %182 = sbr.rel (%p180) target = $region32
        $region31: #{tpu_custom_call.1} parent=27 // pred_region
          %s183 = sand.u32 %s27, 1
          %s184 = scalar_lea.sflag [#allocation3], %s183
          %s185 = sand.u32 %s27, 1
          %s186 = smul.addr %s185, 128
          %s187 = scalar_lea.vmem [#allocation2], %s186
          %s188 = smul.u32 32, %s17
          %s190 = ssub.s32 2048, 2048
          %191 = vsyncadd %s184, %s190
          %s192 = smul.addr %s188, 64
          %s193 = scalar_lea.hbm %s0, %s192
          %s194 = sshll.u32 %s187, 4
          %s195 = int_to_ptr.vmem [resolvable:$true] %s194
          %200 = dma.hbm_to_vmem [thread:$0]  %s193, 2048, %s195, %s184, 64, 64, 4
        $region32: #{tpu_custom_call.1} parent=27 // pred_fallthru
          _
      $region28: #{tpu_custom_call.1} parent=5 // pred_fallthru
        _
      %p201 = scmp.le.s32.totalorder 1, %s17
      %p202 = scmp.lt.s32.totalorder %s17, 3
      %p203 = pnand %p201, %p202
      %p204 = pneg %p203
      // Predicated region
      $region33: #{tpu_custom_call.1} parent=5 // pred_check
        _
      $region34: #{tpu_custom_call.1} parent=5 // pred_check_branch
        %206 = sbr.rel (%p203) target = $region36
      $region35: #{tpu_custom_call.1} parent=5 // pred_region
        %s207 = ssub.s32 %s17, 1
        %s208 = sand.u32 %s30, 1
        %s209 = scalar_lea.sflag [#allocation3], %s208
        %s210 = sand.u32 %s30, 1
        %s211 = smul.addr %s210, 128
        %s212 = scalar_lea.vmem [#allocation2], %s211
        // Predicated region
        $region37: #{tpu_custom_call.1} parent=35 // pred_check
          %p213 = pneg %p43
        $region38: #{tpu_custom_call.1} parent=35 // pred_check_branch
          %215 = sbr.rel (%p213) target = $region40
        $region39: #{tpu_custom_call.1} parent=35 // pred_region
          %216 = dma.done %s209, 2048
        $region40: #{tpu_custom_call.1} parent=35 // pred_fallthru
          _
        // Predicated region
        $region41: #{tpu_custom_call.1} parent=35 // pred_check
          %p217 = pneg %p64
        $region42: #{tpu_custom_call.1} parent=35 // pred_check_branch
          %219 = sbr.rel (%p217) target = $region44
        $region43: #{tpu_custom_call.1} parent=35 // pred_region
          %220 = dma.done [#allocation6], 1024
        $region44: #{tpu_custom_call.1} parent=35 // pred_fallthru
          _
        // Predicated region
        $region45: #{tpu_custom_call.1} parent=35 // pred_check
          %p221 = pneg %p85
        $region46: #{tpu_custom_call.1} parent=35 // pred_check_branch
          %223 = sbr.rel (%p221) target = $region48
        $region47: #{tpu_custom_call.1} parent=35 // pred_region
          %224 = dma.done [#allocation6], 1024
        $region48: #{tpu_custom_call.1} parent=35 // pred_fallthru
          _
        %s225 = sand.u32 %s30, 1
        %s226 = scalar_lea.sflag [#allocation3], %s225
        %s227 = sand.u32 %s30, 1
        %s228 = smul.addr %s227, 128
        %s229 = scalar_lea.vmem [#allocation2], %s228
        %p230 = pneg %p43
        %p231 = pneg %p40
        %p232 = pneg %p64
        %p233 = pneg %p61
        %p234 = pneg %p85
        %p235 = pneg %p82
        %p236 = pneg %p106
        %p237 = pneg %p103
        %p238 = pneg %p132
        %p239 = pneg %p129
        %s240 = sand.u32 %s119, 1
        %s241 = scalar_lea.sflag [#allocation4], %s240
        %s242 = sand.u32 %s119, 1
        %s243 = smul.addr %s242, 128
        %s244 = scalar_lea.vmem [#allocation8], %s243
        %s245 = smul.u32 32, %s22
        %s246 = smul.u32 32, %s22
        %v248 = vld [vmem:[%s212] sm:$0xf]
        %v249 = vld [vmem:[%s212 + $0x4] sm:$0xf]
        %v250 = vld [vmem:[%s212 + $0x8] sm:$0xf]
        %v251 = vld [vmem:[%s212 + $0xc] sm:$0xf]
        %v252 = vld [vmem:[%s212 + $0x10] sm:$0xf]
        %v253 = vld [vmem:[%s212 + $0x14] sm:$0xf]
        %v254 = vld [vmem:[%s212 + $0x18] sm:$0xf]
        %v255 = vld [vmem:[%s212 + $0x1c] sm:$0xf]
        %v256 = vld [vmem:[%s212 + $0x20] sm:$0xf]
        %v257 = vld [vmem:[%s212 + $0x24] sm:$0xf]
        %v258 = vld [vmem:[%s212 + $0x28] sm:$0xf]
        %v259 = vld [vmem:[%s212 + $0x2c] sm:$0xf]
        %v260 = vld [vmem:[%s212 + $0x30] sm:$0xf]
        %v261 = vld [vmem:[%s212 + $0x34] sm:$0xf]
        %v262 = vld [vmem:[%s212 + $0x38] sm:$0xf]
        %v263 = vld [vmem:[%s212 + $0x3c] sm:$0xf]
        %v264 = vld [vmem:[%s212 + $0x40] sm:$0xf]
        %v265 = vld [vmem:[%s212 + $0x44] sm:$0xf]
        %v266 = vld [vmem:[%s212 + $0x48] sm:$0xf]
        %v267 = vld [vmem:[%s212 + $0x4c] sm:$0xf]
        %v268 = vld [vmem:[%s212 + $0x50] sm:$0xf]
        %v269 = vld [vmem:[%s212 + $0x54] sm:$0xf]
        %v270 = vld [vmem:[%s212 + $0x58] sm:$0xf]
        %v271 = vld [vmem:[%s212 + $0x5c] sm:$0xf]
        %v272 = vld [vmem:[%s212 + $0x60] sm:$0xf]
        %v273 = vld [vmem:[%s212 + $0x64] sm:$0xf]
        %v274 = vld [vmem:[%s212 + $0x68] sm:$0xf]
        %v275 = vld [vmem:[%s212 + $0x6c] sm:$0xf]
        %v276 = vld [vmem:[%s212 + $0x70] sm:$0xf]
        %v277 = vld [vmem:[%s212 + $0x74] sm:$0xf]
        %v278 = vld [vmem:[%s212 + $0x78] sm:$0xf]
        %v279 = vld [vmem:[%s212 + $0x7c] sm:$0xf]
        %v280 = vunpack.c.l.bf16 %v248
        %v281 = vunpack.c.l.bf16 %v249
        %v282 = vunpack.c.l.bf16 %v250
        %v283 = vunpack.c.l.bf16 %v251
        %v284 = vunpack.c.l.bf16 %v252
        %v285 = vunpack.c.l.bf16 %v253
        %v286 = vunpack.c.l.bf16 %v254
        %v287 = vunpack.c.l.bf16 %v255
        %v288 = vunpack.c.l.bf16 %v256
        %v289 = vunpack.c.l.bf16 %v257
        %v290 = vunpack.c.l.bf16 %v258
        %v291 = vunpack.c.l.bf16 %v259
        %v292 = vunpack.c.l.bf16 %v260
        %v293 = vunpack.c.l.bf16 %v261
        %v294 = vunpack.c.l.bf16 %v262
        %v295 = vunpack.c.l.bf16 %v263
        %v296 = vunpack.c.l.bf16 %v264
        %v297 = vunpack.c.l.bf16 %v265
        %v298 = vunpack.c.l.bf16 %v266
        %v299 = vunpack.c.l.bf16 %v267
        %v300 = vunpack.c.l.bf16 %v268
        %v301 = vunpack.c.l.bf16 %v269
        %v302 = vunpack.c.l.bf16 %v270
        %v303 = vunpack.c.l.bf16 %v271
        %v304 = vunpack.c.l.bf16 %v272
        %v305 = vunpack.c.l.bf16 %v273
        %v306 = vunpack.c.l.bf16 %v274
        %v307 = vunpack.c.l.bf16 %v275
        %v308 = vunpack.c.l.bf16 %v276
        %v309 = vunpack.c.l.bf16 %v277
        %v310 = vunpack.c.l.bf16 %v278
        %v311 = vunpack.c.l.bf16 %v279
        %v312 = vld [vmem:[%s3] sm:$0xff]
        %v313 = vld [vmem:[#allocation5] sm:$0xf]
        %v314 = vld [vmem:[#allocation5 + $0x4] sm:$0xf]
        %v315 = vld [vmem:[#allocation5 + $0x8] sm:$0xf]
        %v316 = vld [vmem:[#allocation5 + $0xc] sm:$0xf]
        %v317 = vld [vmem:[#allocation5 + $0x10] sm:$0xf]
        %v318 = vld [vmem:[#allocation5 + $0x14] sm:$0xf]
        %v319 = vld [vmem:[#allocation5 + $0x18] sm:$0xf]
        %v320 = vld [vmem:[#allocation5 + $0x1c] sm:$0xf]
        %v321 = vld [vmem:[#allocation5 + $0x20] sm:$0xf]
        %v322 = vld [vmem:[#allocation5 + $0x24] sm:$0xf]
        %v323 = vld [vmem:[#allocation5 + $0x28] sm:$0xf]
        %v324 = vld [vmem:[#allocation5 + $0x2c] sm:$0xf]
        %v325 = vld [vmem:[#allocation5 + $0x30] sm:$0xf]
        %v326 = vld [vmem:[#allocation5 + $0x34] sm:$0xf]
        %v327 = vld [vmem:[#allocation5 + $0x38] sm:$0xf]
        %v328 = vld [vmem:[#allocation5 + $0x3c] sm:$0xf]
        %v329 = vlaneseq
        %v330 = vshrl.u32 %v329, 7
        %v331 = vsub.s32 0, %v330
        %v332 = vrot.slane %v312, %v331
        %v365 = vunpack.c.l.b16 %v248
        %v366 = vunpack.c.l.b16 %v249
        %v367 = vunpack.c.l.b16 %v250
        %v368 = vunpack.c.l.b16 %v251
        %v369 = vunpack.c.l.b16 %v252
        %v370 = vunpack.c.l.b16 %v253
        %v371 = vunpack.c.l.b16 %v254
        %v372 = vunpack.c.l.b16 %v255
        %v373 = vunpack.c.l.b16 %v256
        %v374 = vunpack.c.l.b16 %v257
        %v375 = vunpack.c.l.b16 %v258
        %v376 = vunpack.c.l.b16 %v259
        %v377 = vunpack.c.l.b16 %v260
        %v378 = vunpack.c.l.b16 %v261
        %v379 = vunpack.c.l.b16 %v262
        %v380 = vunpack.c.l.b16 %v263
        %v381 = vunpack.c.l.b16 %v264
        %v382 = vunpack.c.l.b16 %v265
        %v383 = vunpack.c.l.b16 %v266
        %v384 = vunpack.c.l.b16 %v267
        %v385 = vunpack.c.l.b16 %v268
        %v386 = vunpack.c.l.b16 %v269
        %v387 = vunpack.c.l.b16 %v270
        %v388 = vunpack.c.l.b16 %v271
        %v389 = vunpack.c.l.b16 %v272
        %v390 = vunpack.c.l.b16 %v273
        %v391 = vunpack.c.l.b16 %v274
        %v392 = vunpack.c.l.b16 %v275
        %v393 = vunpack.c.l.b16 %v276
        %v394 = vunpack.c.l.b16 %v277
        %v395 = vunpack.c.l.b16 %v278
        %v396 = vunpack.c.l.b16 %v279
        %v397 = vpack.c.b16 %v366, %v365
        %v398 = vpack.c.b16 %v368, %v367
        %v399 = vpack.c.b16 %v370, %v369
        %v400 = vpack.c.b16 %v372, %v371
        %v401 = vpack.c.b16 %v374, %v373
        %v402 = vpack.c.b16 %v376, %v375
        %v403 = vpack.c.b16 %v378, %v377
        %v404 = vpack.c.b16 %v380, %v379
        %v405 = vpack.c.b16 %v382, %v381
        %v406 = vpack.c.b16 %v384, %v383
        %v407 = vpack.c.b16 %v386, %v385
        %v408 = vpack.c.b16 %v388, %v387
        %v409 = vpack.c.b16 %v390, %v389
        %v410 = vpack.c.b16 %v392, %v391
        %v411 = vpack.c.b16 %v394, %v393
        %v412 = vpack.c.b16 %v396, %v395
        %v445 = vunpack.c.l.b16 %v313
        %v446 = vunpack.c.l.b16 %v314
        %v447 = vunpack.c.l.b16 %v315
        %v448 = vunpack.c.l.b16 %v316
        %v449 = vunpack.c.l.b16 %v317
        %v450 = vunpack.c.l.b16 %v318
        %v451 = vunpack.c.l.b16 %v319
        %v452 = vunpack.c.l.b16 %v320
        %v453 = vunpack.c.l.b16 %v321
        %v454 = vunpack.c.l.b16 %v322
        %v455 = vunpack.c.l.b16 %v323
        %v456 = vunpack.c.l.b16 %v324
        %v457 = vunpack.c.l.b16 %v325
        %v458 = vunpack.c.l.b16 %v326
        %v459 = vunpack.c.l.b16 %v327
        %v460 = vunpack.c.l.b16 %v328
        %v461 = vpack.c.b16 %v446, %v445
        %v462 = vpack.c.b16 %v448, %v447
        %v463 = vpack.c.b16 %v450, %v449
        %v464 = vpack.c.b16 %v452, %v451
        %v465 = vpack.c.b16 %v454, %v453
        %v466 = vpack.c.b16 %v456, %v455
        %v467 = vpack.c.b16 %v458, %v457
        %v468 = vpack.c.b16 %v460, %v459
        %477 = vmatprep.subr.bf16.mxu0 0
        %478 = vmatpush1.bf16.msra.mxu0 %v461
        %479 = vmatprep.subr.bf16.mxu0 0
        %480 = vmatpush1.bf16.msra.mxu0 %v462
        %481 = vmatprep.subr.bf16.mxu0 0
        %482 = vmatpush1.bf16.msra.mxu0 %v463
        %483 = vmatprep.subr.bf16.mxu0 0
        %484 = vmatpush1.bf16.msra.mxu0 %v464
        %485 = vmatprep.subr.bf16.mxu0 0
        %486 = vmatpush1.bf16.msra.mxu0 %v465
        %487 = vmatprep.subr.bf16.mxu0 0
        %488 = vmatpush1.bf16.msra.mxu0 %v466
        %489 = vmatprep.subr.bf16.mxu0 0
        %490 = vmatpush1.bf16.msra.mxu0 %v467
        %491 = vmatprep.subr.bf16.mxu0 0
        %492 = vmatpush1.bf16.msra.mxu0 %v468
        %493 = vmatprep.subr.bf16.mxu0 0
        %494 = vmatpush1.bf16.msra.mxu0 0
        %495 = vmatprep.subr.bf16.mxu0 0
        %496 = vmatpush1.bf16.msra.mxu0 0
        %497 = vmatprep.subr.bf16.mxu0 0
        %498 = vmatpush1.bf16.msra.mxu0 0
        %499 = vmatprep.subr.bf16.mxu0 0
        %500 = vmatpush1.bf16.msra.mxu0 0
        %501 = vmatprep.subr.bf16.mxu0 0
        %502 = vmatpush1.bf16.msra.mxu0 0
        %503 = vmatprep.subr.bf16.mxu0 0
        %504 = vmatpush1.bf16.msra.mxu0 0
        %505 = vmatprep.subr.bf16.mxu0 0
        %506 = vmatpush1.bf16.msra.mxu0 0
        %507 = vmatprep.subr.bf16.mxu0 0
        %508 = vmatpush1.bf16.msra.mxu0 0
        %509 = vmatprep.mubr.bf16.mxu0 0
        %510 = vmatmul.mubr.bf16.gmra.mrb[0].mxu0 %v397
        %v511 = vpop.f32.mrb[0].mxu0
        %v512 = vadd.f32 %v332, %v511
        %v513 = vpop.f32.mrb[0].mxu0
        %v514 = vpop.f32.mrb[0].mxu0
        %v515 = vadd.f32 %v332, %v514
        %v516 = vpop.f32.mrb[0].mxu0
        %517 = vmatprep.mubr.bf16.mxu0 0
        %518 = vmatmul.mubr.bf16.gmra.mrb[0].mxu0 %v398
        %v519 = vpop.f32.mrb[0].mxu0
        %v520 = vadd.f32 %v332, %v519
        %v521 = vpop.f32.mrb[0].mxu0
        %v522 = vpop.f32.mrb[0].mxu0
        %v523 = vadd.f32 %v332, %v522
        %v524 = vpop.f32.mrb[0].mxu0
        %525 = vmatprep.mubr.bf16.mxu0 0
        %526 = vmatmul.mubr.bf16.gmra.mrb[0].mxu0 %v399
        %v527 = vpop.f32.mrb[0].mxu0
        %v528 = vadd.f32 %v332, %v527
        %v529 = vpop.f32.mrb[0].mxu0
        %v530 = vpop.f32.mrb[0].mxu0
        %v531 = vadd.f32 %v332, %v530
        %v532 = vpop.f32.mrb[0].mxu0
        %533 = vmatprep.mubr.bf16.mxu0 0
        %534 = vmatmul.mubr.bf16.gmra.mrb[0].mxu0 %v400
        %v535 = vpop.f32.mrb[0].mxu0
        %v536 = vadd.f32 %v332, %v535
        %v537 = vpop.f32.mrb[0].mxu0
        %v538 = vpop.f32.mrb[0].mxu0
        %v539 = vadd.f32 %v332, %v538
        %v540 = vpop.f32.mrb[0].mxu0
        %541 = vmatprep.mubr.bf16.mxu0 0
        %542 = vmatmul.mubr.bf16.gmra.mrb[0].mxu0 %v401
        %v543 = vpop.f32.mrb[0].mxu0
        %v544 = vadd.f32 %v332, %v543
        %v545 = vpop.f32.mrb[0].mxu0
        %v546 = vpop.f32.mrb[0].mxu0
        %v547 = vadd.f32 %v332, %v546
        %v548 = vpop.f32.mrb[0].mxu0
        %549 = vmatprep.mubr.bf16.mxu0 0
        %550 = vmatmul.mubr.bf16.gmra.mrb[0].mxu0 %v402
        %v551 = vpop.f32.mrb[0].mxu0
        %v552 = vadd.f32 %v332, %v551
        %v553 = vpop.f32.mrb[0].mxu0
        %v554 = vpop.f32.mrb[0].mxu0
        %v555 = vadd.f32 %v332, %v554
        %v556 = vpop.f32.mrb[0].mxu0
        %557 = vmatprep.mubr.bf16.mxu0 0
        %558 = vmatmul.mubr.bf16.gmra.mrb[0].mxu0 %v403
        %v559 = vpop.f32.mrb[0].mxu0
        %v560 = vadd.f32 %v332, %v559
        %v561 = vpop.f32.mrb[0].mxu0
        %v562 = vpop.f32.mrb[0].mxu0
        %v563 = vadd.f32 %v332, %v562
        %v564 = vpop.f32.mrb[0].mxu0
        %565 = vmatprep.mubr.bf16.mxu0 0
        %566 = vmatmul.mubr.bf16.gmra.mrb[0].mxu0 %v404
        %v567 = vpop.f32.mrb[0].mxu0
        %v568 = vadd.f32 %v332, %v567
        %v569 = vpop.f32.mrb[0].mxu0
        %v570 = vpop.f32.mrb[0].mxu0
        %v571 = vadd.f32 %v332, %v570
        %v572 = vpop.f32.mrb[0].mxu0
        %573 = vmatprep.mubr.bf16.mxu0 0
        %574 = vmatmul.mubr.bf16.gmra.mrb[0].mxu0 %v405
        %v575 = vpop.f32.mrb[0].mxu0
        %v576 = vadd.f32 %v332, %v575
        %v577 = vpop.f32.mrb[0].mxu0
        %v578 = vpop.f32.mrb[0].mxu0
        %v579 = vadd.f32 %v332, %v578
        %v580 = vpop.f32.mrb[0].mxu0
        %581 = vmatprep.mubr.bf16.mxu0 0
        %582 = vmatmul.mubr.bf16.gmra.mrb[0].mxu0 %v406
        %v583 = vpop.f32.mrb[0].mxu0
        %v584 = vadd.f32 %v332, %v583
        %v585 = vpop.f32.mrb[0].mxu0
        %v586 = vpop.f32.mrb[0].mxu0
        %v587 = vadd.f32 %v332, %v586
        %v588 = vpop.f32.mrb[0].mxu0
        %589 = vmatprep.mubr.bf16.mxu0 0
        %590 = vmatmul.mubr.bf16.gmra.mrb[0].mxu0 %v407
        %v591 = vpop.f32.mrb[0].mxu0
        %v592 = vadd.f32 %v332, %v591
        %v593 = vpop.f32.mrb[0].mxu0
        %v594 = vpop.f32.mrb[0].mxu0
        %v595 = vadd.f32 %v332, %v594
        %v596 = vpop.f32.mrb[0].mxu0
        %597 = vmatprep.mubr.bf16.mxu0 0
        %598 = vmatmul.mubr.bf16.gmra.mrb[0].mxu0 %v408
        %v599 = vpop.f32.mrb[0].mxu0
        %v600 = vadd.f32 %v332, %v599
        %v601 = vpop.f32.mrb[0].mxu0
        %v602 = vpop.f32.mrb[0].mxu0
        %v603 = vadd.f32 %v332, %v602
        %v604 = vpop.f32.mrb[0].mxu0
        %605 = vmatprep.mubr.bf16.mxu0 0
        %606 = vmatmul.mubr.bf16.gmra.mrb[0].mxu0 %v409
        %v607 = vpop.f32.mrb[0].mxu0
        %v608 = vadd.f32 %v332, %v607
        %v609 = vpop.f32.mrb[0].mxu0
        %v610 = vpop.f32.mrb[0].mxu0
        %v611 = vadd.f32 %v332, %v610
        %v612 = vpop.f32.mrb[0].mxu0
        %613 = vmatprep.mubr.bf16.mxu0 0
        %614 = vmatmul.mubr.bf16.gmra.mrb[0].mxu0 %v410
        %v615 = vpop.f32.mrb[0].mxu0
        %v616 = vadd.f32 %v332, %v615
        %v617 = vpop.f32.mrb[0].mxu0
        %v618 = vpop.f32.mrb[0].mxu0
        %v619 = vadd.f32 %v332, %v618
        %v620 = vpop.f32.mrb[0].mxu0
        %621 = vmatprep.mubr.bf16.mxu0 0
        %622 = vmatmul.mubr.bf16.gmra.mrb[0].mxu0 %v411
        %v623 = vpop.f32.mrb[0].mxu0
        %v624 = vadd.f32 %v332, %v623
        %v625 = vpop.f32.mrb[0].mxu0
        %v626 = vpop.f32.mrb[0].mxu0
        %v627 = vadd.f32 %v332, %v626
        %v628 = vpop.f32.mrb[0].mxu0
        %629 = vmatprep.mubr.bf16.mxu0 0
        %630 = vmatmul.mubr.bf16.gmra.mrb[0].mxu0 %v412
        %v631 = vpop.f32.mrb[0].mxu0
        %v632 = vadd.f32 %v332, %v631
        %v633 = vpop.f32.mrb[0].mxu0
        %v634 = vpop.f32.mrb[0].mxu0
        %v635 = vadd.f32 %v332, %v634
        %v636 = vpop.f32.mrb[0].mxu0
        %637 = vdwg.mxu0
        %638 = vadd.xlane.f32.xlu0 %v512
        %v639 = vpop.xlane.xlu0 %638
        %640 = vadd.xlane.f32.xlu0 %v515
        %v641 = vpop.xlane.xlu0 %640
        %642 = vadd.xlane.f32.xlu0 %v520
        %v643 = vpop.xlane.xlu0 %642
        %644 = vadd.xlane.f32.xlu0 %v523
        %v645 = vpop.xlane.xlu0 %644
        %646 = vadd.xlane.f32.xlu0 %v528
        %v647 = vpop.xlane.xlu0 %646
        %648 = vadd.xlane.f32.xlu0 %v531
        %v649 = vpop.xlane.xlu0 %648
        %650 = vadd.xlane.f32.xlu0 %v536
        %v651 = vpop.xlane.xlu0 %650
        %652 = vadd.xlane.f32.xlu0 %v539
        %v653 = vpop.xlane.xlu0 %652
        %654 = vadd.xlane.f32.xlu0 %v544
        %v655 = vpop.xlane.xlu0 %654
        %656 = vadd.xlane.f32.xlu0 %v547
        %v657 = vpop.xlane.xlu0 %656
        %658 = vadd.xlane.f32.xlu0 %v552
        %v659 = vpop.xlane.xlu0 %658
        %660 = vadd.xlane.f32.xlu0 %v555
        %v661 = vpop.xlane.xlu0 %660
        %662 = vadd.xlane.f32.xlu0 %v560
        %v663 = vpop.xlane.xlu0 %662
        %664 = vadd.xlane.f32.xlu0 %v563
        %v665 = vpop.xlane.xlu0 %664
        %666 = vadd.xlane.f32.xlu0 %v568
        %v667 = vpop.xlane.xlu0 %666
        %668 = vadd.xlane.f32.xlu0 %v571
        %v669 = vpop.xlane.xlu0 %668
        %670 = vadd.xlane.f32.xlu0 %v576
        %v671 = vpop.xlane.xlu0 %670
        %672 = vadd.xlane.f32.xlu0 %v579
        %v673 = vpop.xlane.xlu0 %672
        %674 = vadd.xlane.f32.xlu0 %v584
        %v675 = vpop.xlane.xlu0 %674
        %676 = vadd.xlane.f32.xlu0 %v587
        %v677 = vpop.xlane.xlu0 %676
        %678 = vadd.xlane.f32.xlu0 %v592
        %v679 = vpop.xlane.xlu0 %678
        %680 = vadd.xlane.f32.xlu0 %v595
        %v681 = vpop.xlane.xlu0 %680
        %682 = vadd.xlane.f32.xlu0 %v600
        %v683 = vpop.xlane.xlu0 %682
        %684 = vadd.xlane.f32.xlu0 %v603
        %v685 = vpop.xlane.xlu0 %684
        %686 = vadd.xlane.f32.xlu0 %v608
        %v687 = vpop.xlane.xlu0 %686
        %688 = vadd.xlane.f32.xlu0 %v611
        %v689 = vpop.xlane.xlu0 %688
        %690 = vadd.xlane.f32.xlu0 %v616
        %v691 = vpop.xlane.xlu0 %690
        %692 = vadd.xlane.f32.xlu0 %v619
        %v693 = vpop.xlane.xlu0 %692
        %694 = vadd.xlane.f32.xlu0 %v624
        %v695 = vpop.xlane.xlu0 %694
        %696 = vadd.xlane.f32.xlu0 %v627
        %v697 = vpop.xlane.xlu0 %696
        %698 = vadd.xlane.f32.xlu0 %v632
        %v699 = vpop.xlane.xlu0 %698
        %700 = vadd.xlane.f32.xlu0 %v635
        %v701 = vpop.xlane.xlu0 %700
        %v702 = vmul.f32 %v639, 0.0078125
        %v703 = vmul.f32 %v641, 0.0078125
        %v704 = vmul.f32 %v643, 0.0078125
        %v705 = vmul.f32 %v645, 0.0078125
        %v706 = vmul.f32 %v647, 0.0078125
        %v707 = vmul.f32 %v649, 0.0078125
        %v708 = vmul.f32 %v651, 0.0078125
        %v709 = vmul.f32 %v653, 0.0078125
        %v710 = vmul.f32 %v655, 0.0078125
        %v711 = vmul.f32 %v657, 0.0078125
        %v712 = vmul.f32 %v659, 0.0078125
        %v713 = vmul.f32 %v661, 0.0078125
        %v714 = vmul.f32 %v663, 0.0078125
        %v715 = vmul.f32 %v665, 0.0078125
        %v716 = vmul.f32 %v667, 0.0078125
        %v717 = vmul.f32 %v669, 0.0078125
        %v718 = vmul.f32 %v671, 0.0078125
        %v719 = vmul.f32 %v673, 0.0078125
        %v720 = vmul.f32 %v675, 0.0078125
        %v721 = vmul.f32 %v677, 0.0078125
        %v722 = vmul.f32 %v679, 0.0078125
        %v723 = vmul.f32 %v681, 0.0078125
        %v724 = vmul.f32 %v683, 0.0078125
        %v725 = vmul.f32 %v685, 0.0078125
        %v726 = vmul.f32 %v687, 0.0078125
        %v727 = vmul.f32 %v689, 0.0078125
        %v728 = vmul.f32 %v691, 0.0078125
        %v729 = vmul.f32 %v693, 0.0078125
        %v730 = vmul.f32 %v695, 0.0078125
        %v731 = vmul.f32 %v697, 0.0078125
        %v732 = vmul.f32 %v699, 0.0078125
        %v733 = vmul.f32 %v701, 0.0078125
        %v734 = vmul.f32 %v512, %v512
        %v735 = vmul.f32 %v515, %v515
        %v736 = vmul.f32 %v520, %v520
        %v737 = vmul.f32 %v523, %v523
        %v738 = vmul.f32 %v528, %v528
        %v739 = vmul.f32 %v531, %v531
        %v740 = vmul.f32 %v536, %v536
        %v741 = vmul.f32 %v539, %v539
        %v742 = vmul.f32 %v544, %v544
        %v743 = vmul.f32 %v547, %v547
        %v744 = vmul.f32 %v552, %v552
        %v745 = vmul.f32 %v555, %v555
        %v746 = vmul.f32 %v560, %v560
        %v747 = vmul.f32 %v563, %v563
        %v748 = vmul.f32 %v568, %v568
        %v749 = vmul.f32 %v571, %v571
        %v750 = vmul.f32 %v576, %v576
        %v751 = vmul.f32 %v579, %v579
        %v752 = vmul.f32 %v584, %v584
        %v753 = vmul.f32 %v587, %v587
        %v754 = vmul.f32 %v592, %v592
        %v755 = vmul.f32 %v595, %v595
        %v756 = vmul.f32 %v600, %v600
        %v757 = vmul.f32 %v603, %v603
        %v758 = vmul.f32 %v608, %v608
        %v759 = vmul.f32 %v611, %v611
        %v760 = vmul.f32 %v616, %v616
        %v761 = vmul.f32 %v619, %v619
        %v762 = vmul.f32 %v624, %v624
        %v763 = vmul.f32 %v627, %v627
        %v764 = vmul.f32 %v632, %v632
        %v765 = vmul.f32 %v635, %v635
        %766 = vadd.xlane.f32.xlu0 %v734
        %v767 = vpop.xlane.xlu0 %766
        %768 = vadd.xlane.f32.xlu0 %v735
        %v769 = vpop.xlane.xlu0 %768
        %770 = vadd.xlane.f32.xlu0 %v736
        %v771 = vpop.xlane.xlu0 %770
        %772 = vadd.xlane.f32.xlu0 %v737
        %v773 = vpop.xlane.xlu0 %772
        %774 = vadd.xlane.f32.xlu0 %v738
        %v775 = vpop.xlane.xlu0 %774
        %776 = vadd.xlane.f32.xlu0 %v739
        %v777 = vpop.xlane.xlu0 %776
        %778 = vadd.xlane.f32.xlu0 %v740
        %v779 = vpop.xlane.xlu0 %778
        %780 = vadd.xlane.f32.xlu0 %v741
        %v781 = vpop.xlane.xlu0 %780
        %782 = vadd.xlane.f32.xlu0 %v742
        %v783 = vpop.xlane.xlu0 %782
        %784 = vadd.xlane.f32.xlu0 %v743
        %v785 = vpop.xlane.xlu0 %784
        %786 = vadd.xlane.f32.xlu0 %v744
        %v787 = vpop.xlane.xlu0 %786
        %788 = vadd.xlane.f32.xlu0 %v745
        %v789 = vpop.xlane.xlu0 %788
        %790 = vadd.xlane.f32.xlu0 %v746
        %v791 = vpop.xlane.xlu0 %790
        %792 = vadd.xlane.f32.xlu0 %v747
        %v793 = vpop.xlane.xlu0 %792
        %794 = vadd.xlane.f32.xlu0 %v748
        %v795 = vpop.xlane.xlu0 %794
        %796 = vadd.xlane.f32.xlu0 %v749
        %v797 = vpop.xlane.xlu0 %796
        %798 = vadd.xlane.f32.xlu0 %v750
        %v799 = vpop.xlane.xlu0 %798
        %800 = vadd.xlane.f32.xlu0 %v751
        %v801 = vpop.xlane.xlu0 %800
        %802 = vadd.xlane.f32.xlu0 %v752
        %v803 = vpop.xlane.xlu0 %802
        %804 = vadd.xlane.f32.xlu0 %v753
        %v805 = vpop.xlane.xlu0 %804
        %806 = vadd.xlane.f32.xlu0 %v754
        %v807 = vpop.xlane.xlu0 %806
        %808 = vadd.xlane.f32.xlu0 %v755
        %v809 = vpop.xlane.xlu0 %808
        %810 = vadd.xlane.f32.xlu0 %v756
        %v811 = vpop.xlane.xlu0 %810
        %812 = vadd.xlane.f32.xlu0 %v757
        %v813 = vpop.xlane.xlu0 %812
        %814 = vadd.xlane.f32.xlu0 %v758
        %v815 = vpop.xlane.xlu0 %814
        %816 = vadd.xlane.f32.xlu0 %v759
        %v817 = vpop.xlane.xlu0 %816
        %818 = vadd.xlane.f32.xlu0 %v760
        %v819 = vpop.xlane.xlu0 %818
        %820 = vadd.xlane.f32.xlu0 %v761
        %v821 = vpop.xlane.xlu0 %820
        %822 = vadd.xlane.f32.xlu0 %v762
        %v823 = vpop.xlane.xlu0 %822
        %824 = vadd.xlane.f32.xlu0 %v763
        %v825 = vpop.xlane.xlu0 %824
        %826 = vadd.xlane.f32.xlu0 %v764
        %v827 = vpop.xlane.xlu0 %826
        %828 = vadd.xlane.f32.xlu0 %v765
        %v829 = vpop.xlane.xlu0 %828
        %v830 = vmul.f32 %v767, 0.0078125
        %v831 = vmul.f32 %v769, 0.0078125
        %v832 = vmul.f32 %v771, 0.0078125
        %v833 = vmul.f32 %v773, 0.0078125
        %v834 = vmul.f32 %v775, 0.0078125
        %v835 = vmul.f32 %v777, 0.0078125
        %v836 = vmul.f32 %v779, 0.0078125
        %v837 = vmul.f32 %v781, 0.0078125
        %v838 = vmul.f32 %v783, 0.0078125
        %v839 = vmul.f32 %v785, 0.0078125
        %v840 = vmul.f32 %v787, 0.0078125
        %v841 = vmul.f32 %v789, 0.0078125
        %v842 = vmul.f32 %v791, 0.0078125
        %v843 = vmul.f32 %v793, 0.0078125
        %v844 = vmul.f32 %v795, 0.0078125
        %v845 = vmul.f32 %v797, 0.0078125
        %v846 = vmul.f32 %v799, 0.0078125
        %v847 = vmul.f32 %v801, 0.0078125
        %v848 = vmul.f32 %v803, 0.0078125
        %v849 = vmul.f32 %v805, 0.0078125
        %v850 = vmul.f32 %v807, 0.0078125
        %v851 = vmul.f32 %v809, 0.0078125
        %v852 = vmul.f32 %v811, 0.0078125
        %v853 = vmul.f32 %v813, 0.0078125
        %v854 = vmul.f32 %v815, 0.0078125
        %v855 = vmul.f32 %v817, 0.0078125
        %v856 = vmul.f32 %v819, 0.0078125
        %v857 = vmul.f32 %v821, 0.0078125
        %v858 = vmul.f32 %v823, 0.0078125
        %v859 = vmul.f32 %v825, 0.0078125
        %v860 = vmul.f32 %v827, 0.0078125
        %v861 = vmul.f32 %v829, 0.0078125
        %v862 = vmul.f32 %v702, %v702
        %v863 = vmul.f32 %v703, %v703
        %v864 = vmul.f32 %v704, %v704
        %v865 = vmul.f32 %v705, %v705
        %v866 = vmul.f32 %v706, %v706
        %v867 = vmul.f32 %v707, %v707
        %v868 = vmul.f32 %v708, %v708
        %v869 = vmul.f32 %v709, %v709
        %v870 = vmul.f32 %v710, %v710
        %v871 = vmul.f32 %v711, %v711
        %v872 = vmul.f32 %v712, %v712
        %v873 = vmul.f32 %v713, %v713
        %v874 = vmul.f32 %v714, %v714
        %v875 = vmul.f32 %v715, %v715
        %v876 = vmul.f32 %v716, %v716
        %v877 = vmul.f32 %v717, %v717
        %v878 = vmul.f32 %v718, %v718
        %v879 = vmul.f32 %v719, %v719
        %v880 = vmul.f32 %v720, %v720
        %v881 = vmul.f32 %v721, %v721
        %v882 = vmul.f32 %v722, %v722
        %v883 = vmul.f32 %v723, %v723
        %v884 = vmul.f32 %v724, %v724
        %v885 = vmul.f32 %v725, %v725
        %v886 = vmul.f32 %v726, %v726
        %v887 = vmul.f32 %v727, %v727
        %v888 = vmul.f32 %v728, %v728
        %v889 = vmul.f32 %v729, %v729
        %v890 = vmul.f32 %v730, %v730
        %v891 = vmul.f32 %v731, %v731
        %v892 = vmul.f32 %v732, %v732
        %v893 = vmul.f32 %v733, %v733
        %v894 = vsub.f32 %v830, %v862
        %v895 = vsub.f32 %v831, %v863
        %v896 = vsub.f32 %v832, %v864
        %v897 = vsub.f32 %v833, %v865
        %v898 = vsub.f32 %v834, %v866
        %v899 = vsub.f32 %v835, %v867
        %v900 = vsub.f32 %v836, %v868
        %v901 = vsub.f32 %v837, %v869
        %v902 = vsub.f32 %v838, %v870
        %v903 = vsub.f32 %v839, %v871
        %v904 = vsub.f32 %v840, %v872
        %v905 = vsub.f32 %v841, %v873
        %v906 = vsub.f32 %v842, %v874
        %v907 = vsub.f32 %v843, %v875
        %v908 = vsub.f32 %v844, %v876
        %v909 = vsub.f32 %v845, %v877
        %v910 = vsub.f32 %v846, %v878
        %v911 = vsub.f32 %v847, %v879
        %v912 = vsub.f32 %v848, %v880
        %v913 = vsub.f32 %v849, %v881
        %v914 = vsub.f32 %v850, %v882
        %v915 = vsub.f32 %v851, %v883
        %v916 = vsub.f32 %v852, %v884
        %v917 = vsub.f32 %v853, %v885
        %v918 = vsub.f32 %v854, %v886
        %v919 = vsub.f32 %v855, %v887
        %v920 = vsub.f32 %v856, %v888
        %v921 = vsub.f32 %v857, %v889
        %v922 = vsub.f32 %v858, %v890
        %v923 = vsub.f32 %v859, %v891
        %v924 = vsub.f32 %v860, %v892
        %v925 = vsub.f32 %v861, %v893
        %v926 = vmax.f32 %v894, 0.0
        %v927 = vmax.f32 %v895, 0.0
        %v928 = vmax.f32 %v896, 0.0
        %v929 = vmax.f32 %v897, 0.0
        %v930 = vmax.f32 %v898, 0.0
        %v931 = vmax.f32 %v899, 0.0
        %v932 = vmax.f32 %v900, 0.0
        %v933 = vmax.f32 %v901, 0.0
        %v934 = vmax.f32 %v902, 0.0
        %v935 = vmax.f32 %v903, 0.0
        %v936 = vmax.f32 %v904, 0.0
        %v937 = vmax.f32 %v905, 0.0
        %v938 = vmax.f32 %v906, 0.0
        %v939 = vmax.f32 %v907, 0.0
        %v940 = vmax.f32 %v908, 0.0
        %v941 = vmax.f32 %v909, 0.0
        %v942 = vmax.f32 %v910, 0.0
        %v943 = vmax.f32 %v911, 0.0
        %v944 = vmax.f32 %v912, 0.0
        %v945 = vmax.f32 %v913, 0.0
        %v946 = vmax.f32 %v914, 0.0
        %v947 = vmax.f32 %v915, 0.0
        %v948 = vmax.f32 %v916, 0.0
        %v949 = vmax.f32 %v917, 0.0
        %v950 = vmax.f32 %v918, 0.0
        %v951 = vmax.f32 %v919, 0.0
        %v952 = vmax.f32 %v920, 0.0
        %v953 = vmax.f32 %v921, 0.0
        %v954 = vmax.f32 %v922, 0.0
        %v955 = vmax.f32 %v923, 0.0
        %v956 = vmax.f32 %v924, 0.0
        %v957 = vmax.f32 %v925, 0.0
        %v958 = vsub.f32 %v512, %v702
        %v959 = vsub.f32 %v515, %v703
        %v960 = vsub.f32 %v520, %v704
        %v961 = vsub.f32 %v523, %v705
        %v962 = vsub.f32 %v528, %v706
        %v963 = vsub.f32 %v531, %v707
        %v964 = vsub.f32 %v536, %v708
        %v965 = vsub.f32 %v539, %v709
        %v966 = vsub.f32 %v544, %v710
        %v967 = vsub.f32 %v547, %v711
        %v968 = vsub.f32 %v552, %v712
        %v969 = vsub.f32 %v555, %v713
        %v970 = vsub.f32 %v560, %v714
        %v971 = vsub.f32 %v563, %v715
        %v972 = vsub.f32 %v568, %v716
        %v973 = vsub.f32 %v571, %v717
        %v974 = vsub.f32 %v576, %v718
        %v975 = vsub.f32 %v579, %v719
        %v976 = vsub.f32 %v584, %v720
        %v977 = vsub.f32 %v587, %v721
        %v978 = vsub.f32 %v592, %v722
        %v979 = vsub.f32 %v595, %v723
        %v980 = vsub.f32 %v600, %v724
        %v981 = vsub.f32 %v603, %v725
        %v982 = vsub.f32 %v608, %v726
        %v983 = vsub.f32 %v611, %v727
        %v984 = vsub.f32 %v616, %v728
        %v985 = vsub.f32 %v619, %v729
        %v986 = vsub.f32 %v624, %v730
        %v987 = vsub.f32 %v627, %v731
        %v988 = vsub.f32 %v632, %v732
        %v989 = vsub.f32 %v635, %v733
        %v990 = vadd.f32 %v926, 1e-05
        %v991 = vadd.f32 %v927, 1e-05
        %v992 = vadd.f32 %v928, 1e-05
        %v993 = vadd.f32 %v929, 1e-05
        %v994 = vadd.f32 %v930, 1e-05
        %v995 = vadd.f32 %v931, 1e-05
        %v996 = vadd.f32 %v932, 1e-05
        %v997 = vadd.f32 %v933, 1e-05
        %v998 = vadd.f32 %v934, 1e-05
        %v999 = vadd.f32 %v935, 1e-05
        %v1000 = vadd.f32 %v936, 1e-05
        %v1001 = vadd.f32 %v937, 1e-05
        %v1002 = vadd.f32 %v938, 1e-05
        %v1003 = vadd.f32 %v939, 1e-05
        %v1004 = vadd.f32 %v940, 1e-05
        %v1005 = vadd.f32 %v941, 1e-05
        %v1006 = vadd.f32 %v942, 1e-05
        %v1007 = vadd.f32 %v943, 1e-05
        %v1008 = vadd.f32 %v944, 1e-05
        %v1009 = vadd.f32 %v945, 1e-05
        %v1010 = vadd.f32 %v946, 1e-05
        %v1011 = vadd.f32 %v947, 1e-05
        %v1012 = vadd.f32 %v948, 1e-05
        %v1013 = vadd.f32 %v949, 1e-05
        %v1014 = vadd.f32 %v950, 1e-05
        %v1015 = vadd.f32 %v951, 1e-05
        %v1016 = vadd.f32 %v952, 1e-05
        %v1017 = vadd.f32 %v953, 1e-05
        %v1018 = vadd.f32 %v954, 1e-05
        %v1019 = vadd.f32 %v955, 1e-05
        %v1020 = vadd.f32 %v956, 1e-05
        %v1021 = vadd.f32 %v957, 1e-05
        %v1022 = vrsqrt.pop %v990
        %v1023 = vrsqrt.pop %v991
        %v1024 = vrsqrt.pop %v992
        %v1025 = vrsqrt.pop %v993
        %v1026 = vrsqrt.pop %v994
        %v1027 = vrsqrt.pop %v995
        %v1028 = vrsqrt.pop %v996
        %v1029 = vrsqrt.pop %v997
        %v1030 = vrsqrt.pop %v998
        %v1031 = vrsqrt.pop %v999
        %v1032 = vrsqrt.pop %v1000
        %v1033 = vrsqrt.pop %v1001
        %v1034 = vrsqrt.pop %v1002
        %v1035 = vrsqrt.pop %v1003
        %v1036 = vrsqrt.pop %v1004
        %v1037 = vrsqrt.pop %v1005
        %v1038 = vrsqrt.pop %v1006
        %v1039 = vrsqrt.pop %v1007
        %v1040 = vrsqrt.pop %v1008
        %v1041 = vrsqrt.pop %v1009
        %v1042 = vrsqrt.pop %v1010
        %v1043 = vrsqrt.pop %v1011
        %v1044 = vrsqrt.pop %v1012
        %v1045 = vrsqrt.pop %v1013
        %v1046 = vrsqrt.pop %v1014
        %v1047 = vrsqrt.pop %v1015
        %v1048 = vrsqrt.pop %v1016
        %v1049 = vrsqrt.pop %v1017
        %v1050 = vrsqrt.pop %v1018
        %v1051 = vrsqrt.pop %v1019
        %v1052 = vrsqrt.pop %v1020
        %v1053 = vrsqrt.pop %v1021
        %v1054 = vmul.f32 %v958, %v1022
        %v1055 = vmul.f32 %v959, %v1023
        %v1056 = vmul.f32 %v960, %v1024
        %v1057 = vmul.f32 %v961, %v1025
        %v1058 = vmul.f32 %v962, %v1026
        %v1059 = vmul.f32 %v963, %v1027
        %v1060 = vmul.f32 %v964, %v1028
        %v1061 = vmul.f32 %v965, %v1029
        %v1062 = vmul.f32 %v966, %v1030
        %v1063 = vmul.f32 %v967, %v1031
        %v1064 = vmul.f32 %v968, %v1032
        %v1065 = vmul.f32 %v969, %v1033
        %v1066 = vmul.f32 %v970, %v1034
        %v1067 = vmul.f32 %v971, %v1035
        %v1068 = vmul.f32 %v972, %v1036
        %v1069 = vmul.f32 %v973, %v1037
        %v1070 = vmul.f32 %v974, %v1038
        %v1071 = vmul.f32 %v975, %v1039
        %v1072 = vmul.f32 %v976, %v1040
        %v1073 = vmul.f32 %v977, %v1041
        %v1074 = vmul.f32 %v978, %v1042
        %v1075 = vmul.f32 %v979, %v1043
        %v1076 = vmul.f32 %v980, %v1044
        %v1077 = vmul.f32 %v981, %v1045
        %v1078 = vmul.f32 %v982, %v1046
        %v1079 = vmul.f32 %v983, %v1047
        %v1080 = vmul.f32 %v984, %v1048
        %v1081 = vmul.f32 %v985, %v1049
        %v1082 = vmul.f32 %v986, %v1050
        %v1083 = vmul.f32 %v987, %v1051
        %v1084 = vmul.f32 %v988, %v1052
        %v1085 = vmul.f32 %v989, %v1053
        %v1086 = vlaneseq
        %v1087 = vshrl.u32 %v1086, 7
        %v1088 = vsub.s32 1, %v1087
        %v1089 = vrot.slane %v312, %v1088
        %v1090 = vmul.f32 %v1054, %v1089
        %v1091 = vmul.f32 %v1055, %v1089
        %v1092 = vmul.f32 %v1056, %v1089
        %v1093 = vmul.f32 %v1057, %v1089
        %v1094 = vmul.f32 %v1058, %v1089
        %v1095 = vmul.f32 %v1059, %v1089
        %v1096 = vmul.f32 %v1060, %v1089
        %v1097 = vmul.f32 %v1061, %v1089
        %v1098 = vmul.f32 %v1062, %v1089
        %v1099 = vmul.f32 %v1063, %v1089
        %v1100 = vmul.f32 %v1064, %v1089
        %v1101 = vmul.f32 %v1065, %v1089
        %v1102 = vmul.f32 %v1066, %v1089
        %v1103 = vmul.f32 %v1067, %v1089
        %v1104 = vmul.f32 %v1068, %v1089
        %v1105 = vmul.f32 %v1069, %v1089
        %v1106 = vmul.f32 %v1070, %v1089
        %v1107 = vmul.f32 %v1071, %v1089
        %v1108 = vmul.f32 %v1072, %v1089
        %v1109 = vmul.f32 %v1073, %v1089
        %v1110 = vmul.f32 %v1074, %v1089
        %v1111 = vmul.f32 %v1075, %v1089
        %v1112 = vmul.f32 %v1076, %v1089
        %v1113 = vmul.f32 %v1077, %v1089
        %v1114 = vmul.f32 %v1078, %v1089
        %v1115 = vmul.f32 %v1079, %v1089
        %v1116 = vmul.f32 %v1080, %v1089
        %v1117 = vmul.f32 %v1081, %v1089
        %v1118 = vmul.f32 %v1082, %v1089
        %v1119 = vmul.f32 %v1083, %v1089
        %v1120 = vmul.f32 %v1084, %v1089
        %v1121 = vmul.f32 %v1085, %v1089
        %v1122 = vlaneseq
        %v1123 = vshrl.u32 %v1122, 7
        %v1124 = vsub.s32 2, %v1123
        %v1125 = vrot.slane %v312, %v1124
        %v1126 = vadd.f32 %v1090, %v1125
        %v1127 = vadd.f32 %v1091, %v1125
        %v1128 = vadd.f32 %v1092, %v1125
        %v1129 = vadd.f32 %v1093, %v1125
        %v1130 = vadd.f32 %v1094, %v1125
        %v1131 = vadd.f32 %v1095, %v1125
        %v1132 = vadd.f32 %v1096, %v1125
        %v1133 = vadd.f32 %v1097, %v1125
        %v1134 = vadd.f32 %v1098, %v1125
        %v1135 = vadd.f32 %v1099, %v1125
        %v1136 = vadd.f32 %v1100, %v1125
        %v1137 = vadd.f32 %v1101, %v1125
        %v1138 = vadd.f32 %v1102, %v1125
        %v1139 = vadd.f32 %v1103, %v1125
        %v1140 = vadd.f32 %v1104, %v1125
        %v1141 = vadd.f32 %v1105, %v1125
        %v1142 = vadd.f32 %v1106, %v1125
        %v1143 = vadd.f32 %v1107, %v1125
        %v1144 = vadd.f32 %v1108, %v1125
        %v1145 = vadd.f32 %v1109, %v1125
        %v1146 = vadd.f32 %v1110, %v1125
        %v1147 = vadd.f32 %v1111, %v1125
        %v1148 = vadd.f32 %v1112, %v1125
        %v1149 = vadd.f32 %v1113, %v1125
        %v1150 = vadd.f32 %v1114, %v1125
        %v1151 = vadd.f32 %v1115, %v1125
        %v1152 = vadd.f32 %v1116, %v1125
        %v1153 = vadd.f32 %v1117, %v1125
        %v1154 = vadd.f32 %v1118, %v1125
        %v1155 = vadd.f32 %v1119, %v1125
        %v1156 = vadd.f32 %v1120, %v1125
        %v1157 = vadd.f32 %v1121, %v1125
        %v1158 = vmul.f32 %v1126, 0.5
        %v1159 = vmul.f32 %v1127, 0.5
        %v1160 = vmul.f32 %v1128, 0.5
        %v1161 = vmul.f32 %v1129, 0.5
        %v1162 = vmul.f32 %v1130, 0.5
        %v1163 = vmul.f32 %v1131, 0.5
        %v1164 = vmul.f32 %v1132, 0.5
        %v1165 = vmul.f32 %v1133, 0.5
        %v1166 = vmul.f32 %v1134, 0.5
        %v1167 = vmul.f32 %v1135, 0.5
        %v1168 = vmul.f32 %v1136, 0.5
        %v1169 = vmul.f32 %v1137, 0.5
        %v1170 = vmul.f32 %v1138, 0.5
        %v1171 = vmul.f32 %v1139, 0.5
        %v1172 = vmul.f32 %v1140, 0.5
        %v1173 = vmul.f32 %v1141, 0.5
        %v1174 = vmul.f32 %v1142, 0.5
        %v1175 = vmul.f32 %v1143, 0.5
        %v1176 = vmul.f32 %v1144, 0.5
        %v1177 = vmul.f32 %v1145, 0.5
        %v1178 = vmul.f32 %v1146, 0.5
        %v1179 = vmul.f32 %v1147, 0.5
        %v1180 = vmul.f32 %v1148, 0.5
        %v1181 = vmul.f32 %v1149, 0.5
        %v1182 = vmul.f32 %v1150, 0.5
        %v1183 = vmul.f32 %v1151, 0.5
        %v1184 = vmul.f32 %v1152, 0.5
        %v1185 = vmul.f32 %v1153, 0.5
        %v1186 = vmul.f32 %v1154, 0.5
        %v1187 = vmul.f32 %v1155, 0.5
        %v1188 = vmul.f32 %v1156, 0.5
        %v1189 = vmul.f32 %v1157, 0.5
        %v1190 = vtanh.pop %v1158
        %v1191 = vtanh.pop %v1159
        %v1192 = vtanh.pop %v1160
        %v1193 = vtanh.pop %v1161
        %v1194 = vtanh.pop %v1162
        %v1195 = vtanh.pop %v1163
        %v1196 = vtanh.pop %v1164
        %v1197 = vtanh.pop %v1165
        %v1198 = vtanh.pop %v1166
        %v1199 = vtanh.pop %v1167
        %v1200 = vtanh.pop %v1168
        %v1201 = vtanh.pop %v1169
        %v1202 = vtanh.pop %v1170
        %v1203 = vtanh.pop %v1171
        %v1204 = vtanh.pop %v1172
        %v1205 = vtanh.pop %v1173
        %v1206 = vtanh.pop %v1174
        %v1207 = vtanh.pop %v1175
        %v1208 = vtanh.pop %v1176
        %v1209 = vtanh.pop %v1177
        %v1210 = vtanh.pop %v1178
        %v1211 = vtanh.pop %v1179
        %v1212 = vtanh.pop %v1180
        %v1213 = vtanh.pop %v1181
        %v1214 = vtanh.pop %v1182
        %v1215 = vtanh.pop %v1183
        %v1216 = vtanh.pop %v1184
        %v1217 = vtanh.pop %v1185
        %v1218 = vtanh.pop %v1186
        %v1219 = vtanh.pop %v1187
        %v1220 = vtanh.pop %v1188
        %v1221 = vtanh.pop %v1189
        %v1222 = vadd.f32 %v1190, 1.0
        %v1223 = vadd.f32 %v1191, 1.0
        %v1224 = vadd.f32 %v1192, 1.0
        %v1225 = vadd.f32 %v1193, 1.0
        %v1226 = vadd.f32 %v1194, 1.0
        %v1227 = vadd.f32 %v1195, 1.0
        %v1228 = vadd.f32 %v1196, 1.0
        %v1229 = vadd.f32 %v1197, 1.0
        %v1230 = vadd.f32 %v1198, 1.0
        %v1231 = vadd.f32 %v1199, 1.0
        %v1232 = vadd.f32 %v1200, 1.0
        %v1233 = vadd.f32 %v1201, 1.0
        %v1234 = vadd.f32 %v1202, 1.0
        %v1235 = vadd.f32 %v1203, 1.0
        %v1236 = vadd.f32 %v1204, 1.0
        %v1237 = vadd.f32 %v1205, 1.0
        %v1238 = vadd.f32 %v1206, 1.0
        %v1239 = vadd.f32 %v1207, 1.0
        %v1240 = vadd.f32 %v1208, 1.0
        %v1241 = vadd.f32 %v1209, 1.0
        %v1242 = vadd.f32 %v1210, 1.0
        %v1243 = vadd.f32 %v1211, 1.0
        %v1244 = vadd.f32 %v1212, 1.0
        %v1245 = vadd.f32 %v1213, 1.0
        %v1246 = vadd.f32 %v1214, 1.0
        %v1247 = vadd.f32 %v1215, 1.0
        %v1248 = vadd.f32 %v1216, 1.0
        %v1249 = vadd.f32 %v1217, 1.0
        %v1250 = vadd.f32 %v1218, 1.0
        %v1251 = vadd.f32 %v1219, 1.0
        %v1252 = vadd.f32 %v1220, 1.0
        %v1253 = vadd.f32 %v1221, 1.0
        %v1254 = vmul.f32 %v1158, %v1222
        %v1255 = vmul.f32 %v1159, %v1223
        %v1256 = vmul.f32 %v1160, %v1224
        %v1257 = vmul.f32 %v1161, %v1225
        %v1258 = vmul.f32 %v1162, %v1226
        %v1259 = vmul.f32 %v1163, %v1227
        %v1260 = vmul.f32 %v1164, %v1228
        %v1261 = vmul.f32 %v1165, %v1229
        %v1262 = vmul.f32 %v1166, %v1230
        %v1263 = vmul.f32 %v1167, %v1231
        %v1264 = vmul.f32 %v1168, %v1232
        %v1265 = vmul.f32 %v1169, %v1233
        %v1266 = vmul.f32 %v1170, %v1234
        %v1267 = vmul.f32 %v1171, %v1235
        %v1268 = vmul.f32 %v1172, %v1236
        %v1269 = vmul.f32 %v1173, %v1237
        %v1270 = vmul.f32 %v1174, %v1238
        %v1271 = vmul.f32 %v1175, %v1239
        %v1272 = vmul.f32 %v1176, %v1240
        %v1273 = vmul.f32 %v1177, %v1241
        %v1274 = vmul.f32 %v1178, %v1242
        %v1275 = vmul.f32 %v1179, %v1243
        %v1276 = vmul.f32 %v1180, %v1244
        %v1277 = vmul.f32 %v1181, %v1245
        %v1278 = vmul.f32 %v1182, %v1246
        %v1279 = vmul.f32 %v1183, %v1247
        %v1280 = vmul.f32 %v1184, %v1248
        %v1281 = vmul.f32 %v1185, %v1249
        %v1282 = vmul.f32 %v1186, %v1250
        %v1283 = vmul.f32 %v1187, %v1251
        %v1284 = vmul.f32 %v1188, %v1252
        %v1285 = vmul.f32 %v1189, %v1253
        %v1286 = vpack.c.bf16 %v1255, %v1254
        %v1287 = vpack.c.bf16 %v1257, %v1256
        %v1288 = vpack.c.bf16 %v1259, %v1258
        %v1289 = vpack.c.bf16 %v1261, %v1260
        %v1290 = vpack.c.bf16 %v1263, %v1262
        %v1291 = vpack.c.bf16 %v1265, %v1264
        %v1292 = vpack.c.bf16 %v1267, %v1266
        %v1293 = vpack.c.bf16 %v1269, %v1268
        %v1294 = vpack.c.bf16 %v1271, %v1270
        %v1295 = vpack.c.bf16 %v1273, %v1272
        %v1296 = vpack.c.bf16 %v1275, %v1274
        %v1297 = vpack.c.bf16 %v1277, %v1276
        %v1298 = vpack.c.bf16 %v1279, %v1278
        %v1299 = vpack.c.bf16 %v1281, %v1280
        %v1300 = vpack.c.bf16 %v1283, %v1282
        %v1301 = vpack.c.bf16 %v1285, %v1284
        %v1302 = vld [vmem:[#allocation7] sm:$0xf]
        %v1303 = vld [vmem:[#allocation7 + $0x4] sm:$0xf]
        %v1304 = vld [vmem:[#allocation7 + $0x8] sm:$0xf]
        %v1305 = vld [vmem:[#allocation7 + $0xc] sm:$0xf]
        %v1306 = vld [vmem:[#allocation7 + $0x10] sm:$0xf]
        %v1307 = vld [vmem:[#allocation7 + $0x14] sm:$0xf]
        %v1308 = vld [vmem:[#allocation7 + $0x18] sm:$0xf]
        %v1309 = vld [vmem:[#allocation7 + $0x1c] sm:$0xf]
        %v1310 = vld [vmem:[#allocation7 + $0x20] sm:$0xf]
        %v1311 = vld [vmem:[#allocation7 + $0x24] sm:$0xf]
        %v1312 = vld [vmem:[#allocation7 + $0x28] sm:$0xf]
        %v1313 = vld [vmem:[#allocation7 + $0x2c] sm:$0xf]
        %v1314 = vld [vmem:[#allocation7 + $0x30] sm:$0xf]
        %v1315 = vld [vmem:[#allocation7 + $0x34] sm:$0xf]
        %v1316 = vld [vmem:[#allocation7 + $0x38] sm:$0xf]
        %v1317 = vld [vmem:[#allocation7 + $0x3c] sm:$0xf]
        %v1334 = vunpack.c.l.b16 %v1302
        %v1335 = vunpack.c.l.b16 %v1303
        %v1336 = vunpack.c.l.b16 %v1304
        %v1337 = vunpack.c.l.b16 %v1305
        %v1338 = vunpack.c.l.b16 %v1306
        %v1339 = vunpack.c.l.b16 %v1307
        %v1340 = vunpack.c.l.b16 %v1308
        %v1341 = vunpack.c.l.b16 %v1309
        %v1342 = vunpack.c.l.b16 %v1310
        %v1343 = vunpack.c.l.b16 %v1311
        %v1344 = vunpack.c.l.b16 %v1312
        %v1345 = vunpack.c.l.b16 %v1313
        %v1346 = vunpack.c.l.b16 %v1314
        %v1347 = vunpack.c.l.b16 %v1315
        %v1348 = vunpack.c.l.b16 %v1316
        %v1349 = vunpack.c.l.b16 %v1317
        %v1350 = vpack.c.b16 %v1335, %v1334
        %v1351 = vpack.c.b16 %v1337, %v1336
        %v1352 = vpack.c.b16 %v1339, %v1338
        %v1353 = vpack.c.b16 %v1341, %v1340
        %v1354 = vpack.c.b16 %v1343, %v1342
        %v1355 = vpack.c.b16 %v1345, %v1344
        %v1356 = vpack.c.b16 %v1347, %v1346
        %v1357 = vpack.c.b16 %v1349, %v1348
        %1366 = vmatprep.subr.bf16.mxu0 0
        %1367 = vmatpush1.bf16.msra.mxu0 %v1350
        %1368 = vmatprep.subr.bf16.mxu0 0
        %1369 = vmatpush1.bf16.msra.mxu0 %v1351
        %1370 = vmatprep.subr.bf16.mxu0 0
        %1371 = vmatpush1.bf16.msra.mxu0 %v1352
        %1372 = vmatprep.subr.bf16.mxu0 0
        %1373 = vmatpush1.bf16.msra.mxu0 %v1353
        %1374 = vmatprep.subr.bf16.mxu0 0
        %1375 = vmatpush1.bf16.msra.mxu0 %v1354
        %1376 = vmatprep.subr.bf16.mxu0 0
        %1377 = vmatpush1.bf16.msra.mxu0 %v1355
        %1378 = vmatprep.subr.bf16.mxu0 0
        %1379 = vmatpush1.bf16.msra.mxu0 %v1356
        %1380 = vmatprep.subr.bf16.mxu0 0
        %1381 = vmatpush1.bf16.msra.mxu0 %v1357
        %1382 = vmatprep.subr.bf16.mxu0 0
        %1383 = vmatpush1.bf16.msra.mxu0 0
        %1384 = vmatprep.subr.bf16.mxu0 0
        %1385 = vmatpush1.bf16.msra.mxu0 0
        %1386 = vmatprep.subr.bf16.mxu0 0
        %1387 = vmatpush1.bf16.msra.mxu0 0
        %1388 = vmatprep.subr.bf16.mxu0 0
        %1389 = vmatpush1.bf16.msra.mxu0 0
        %1390 = vmatprep.subr.bf16.mxu0 0
        %1391 = vmatpush1.bf16.msra.mxu0 0
        %1392 = vmatprep.subr.bf16.mxu0 0
        %1393 = vmatpush1.bf16.msra.mxu0 0
        %1394 = vmatprep.subr.bf16.mxu0 0
        %1395 = vmatpush1.bf16.msra.mxu0 0
        %1396 = vmatprep.subr.bf16.mxu0 0
        %1397 = vmatpush1.bf16.msra.mxu0 0
        %1398 = vmatprep.mubr.bf16.mxu0 0
        %1399 = vmatmul.mubr.bf16.gmra.mrb[0].mxu0 %v1286
        %v1400 = vpop.f32.mrb[0].mxu0
        %v1401 = vadd.f32 0.0, %v1400
        %v1402 = vpop.f32.mrb[0].mxu0
        %v1403 = vpop.f32.mrb[0].mxu0
        %v1404 = vadd.f32 0.0, %v1403
        %v1405 = vpop.f32.mrb[0].mxu0
        %1406 = vmatprep.mubr.bf16.mxu0 0
        %1407 = vmatmul.mubr.bf16.gmra.mrb[0].mxu0 %v1287
        %v1408 = vpop.f32.mrb[0].mxu0
        %v1409 = vadd.f32 0.0, %v1408
        %v1410 = vpop.f32.mrb[0].mxu0
        %v1411 = vpop.f32.mrb[0].mxu0
        %v1412 = vadd.f32 0.0, %v1411
        %v1413 = vpop.f32.mrb[0].mxu0
        %1414 = vmatprep.mubr.bf16.mxu0 0
        %1415 = vmatmul.mubr.bf16.gmra.mrb[0].mxu0 %v1288
        %v1416 = vpop.f32.mrb[0].mxu0
        %v1417 = vadd.f32 0.0, %v1416
        %v1418 = vpop.f32.mrb[0].mxu0
        %v1419 = vpop.f32.mrb[0].mxu0
        %v1420 = vadd.f32 0.0, %v1419
        %v1421 = vpop.f32.mrb[0].mxu0
        %1422 = vmatprep.mubr.bf16.mxu0 0
        %1423 = vmatmul.mubr.bf16.gmra.mrb[0].mxu0 %v1289
        %v1424 = vpop.f32.mrb[0].mxu0
        %v1425 = vadd.f32 0.0, %v1424
        %v1426 = vpop.f32.mrb[0].mxu0
        %v1427 = vpop.f32.mrb[0].mxu0
        %v1428 = vadd.f32 0.0, %v1427
        %v1429 = vpop.f32.mrb[0].mxu0
        %1430 = vmatprep.mubr.bf16.mxu0 0
        %1431 = vmatmul.mubr.bf16.gmra.mrb[0].mxu0 %v1290
        %v1432 = vpop.f32.mrb[0].mxu0
        %v1433 = vadd.f32 0.0, %v1432
        %v1434 = vpop.f32.mrb[0].mxu0
        %v1435 = vpop.f32.mrb[0].mxu0
        %v1436 = vadd.f32 0.0, %v1435
        %v1437 = vpop.f32.mrb[0].mxu0
        %1438 = vmatprep.mubr.bf16.mxu0 0
        %1439 = vmatmul.mubr.bf16.gmra.mrb[0].mxu0 %v1291
        %v1440 = vpop.f32.mrb[0].mxu0
        %v1441 = vadd.f32 0.0, %v1440
        %v1442 = vpop.f32.mrb[0].mxu0
        %v1443 = vpop.f32.mrb[0].mxu0
        %v1444 = vadd.f32 0.0, %v1443
        %v1445 = vpop.f32.mrb[0].mxu0
        %1446 = vmatprep.mubr.bf16.mxu0 0
        %1447 = vmatmul.mubr.bf16.gmra.mrb[0].mxu0 %v1292
        %v1448 = vpop.f32.mrb[0].mxu0
        %v1449 = vadd.f32 0.0, %v1448
        %v1450 = vpop.f32.mrb[0].mxu0
        %v1451 = vpop.f32.mrb[0].mxu0
        %v1452 = vadd.f32 0.0, %v1451
        %v1453 = vpop.f32.mrb[0].mxu0
        %1454 = vmatprep.mubr.bf16.mxu0 0
        %1455 = vmatmul.mubr.bf16.gmra.mrb[0].mxu0 %v1293
        %v1456 = vpop.f32.mrb[0].mxu0
        %v1457 = vadd.f32 0.0, %v1456
        %v1458 = vpop.f32.mrb[0].mxu0
        %v1459 = vpop.f32.mrb[0].mxu0
        %v1460 = vadd.f32 0.0, %v1459
        %v1461 = vpop.f32.mrb[0].mxu0
        %1462 = vmatprep.mubr.bf16.mxu0 0
        %1463 = vmatmul.mubr.bf16.gmra.mrb[0].mxu0 %v1294
        %v1464 = vpop.f32.mrb[0].mxu0
        %v1465 = vadd.f32 0.0, %v1464
        %v1466 = vpop.f32.mrb[0].mxu0
        %v1467 = vpop.f32.mrb[0].mxu0
        %v1468 = vadd.f32 0.0, %v1467
        %v1469 = vpop.f32.mrb[0].mxu0
        %1470 = vmatprep.mubr.bf16.mxu0 0
        %1471 = vmatmul.mubr.bf16.gmra.mrb[0].mxu0 %v1295
        %v1472 = vpop.f32.mrb[0].mxu0
        %v1473 = vadd.f32 0.0, %v1472
        %v1474 = vpop.f32.mrb[0].mxu0
        %v1475 = vpop.f32.mrb[0].mxu0
        %v1476 = vadd.f32 0.0, %v1475
        %v1477 = vpop.f32.mrb[0].mxu0
        %1478 = vmatprep.mubr.bf16.mxu0 0
        %1479 = vmatmul.mubr.bf16.gmra.mrb[0].mxu0 %v1296
        %v1480 = vpop.f32.mrb[0].mxu0
        %v1481 = vadd.f32 0.0, %v1480
        %v1482 = vpop.f32.mrb[0].mxu0
        %v1483 = vpop.f32.mrb[0].mxu0
        %v1484 = vadd.f32 0.0, %v1483
        %v1485 = vpop.f32.mrb[0].mxu0
        %1486 = vmatprep.mubr.bf16.mxu0 0
        %1487 = vmatmul.mubr.bf16.gmra.mrb[0].mxu0 %v1297
        %v1488 = vpop.f32.mrb[0].mxu0
        %v1489 = vadd.f32 0.0, %v1488
        %v1490 = vpop.f32.mrb[0].mxu0
        %v1491 = vpop.f32.mrb[0].mxu0
        %v1492 = vadd.f32 0.0, %v1491
        %v1493 = vpop.f32.mrb[0].mxu0
        %1494 = vmatprep.mubr.bf16.mxu0 0
        %1495 = vmatmul.mubr.bf16.gmra.mrb[0].mxu0 %v1298
        %v1496 = vpop.f32.mrb[0].mxu0
        %v1497 = vadd.f32 0.0, %v1496
        %v1498 = vpop.f32.mrb[0].mxu0
        %v1499 = vpop.f32.mrb[0].mxu0
        %v1500 = vadd.f32 0.0, %v1499
        %v1501 = vpop.f32.mrb[0].mxu0
        %1502 = vmatprep.mubr.bf16.mxu0 0
        %1503 = vmatmul.mubr.bf16.gmra.mrb[0].mxu0 %v1299
        %v1504 = vpop.f32.mrb[0].mxu0
        %v1505 = vadd.f32 0.0, %v1504
        %v1506 = vpop.f32.mrb[0].mxu0
        %v1507 = vpop.f32.mrb[0].mxu0
        %v1508 = vadd.f32 0.0, %v1507
        %v1509 = vpop.f32.mrb[0].mxu0
        %1510 = vmatprep.mubr.bf16.mxu0 0
        %1511 = vmatmul.mubr.bf16.gmra.mrb[0].mxu0 %v1300
        %v1512 = vpop.f32.mrb[0].mxu0
        %v1513 = vadd.f32 0.0, %v1512
        %v1514 = vpop.f32.mrb[0].mxu0
        %v1515 = vpop.f32.mrb[0].mxu0
        %v1516 = vadd.f32 0.0, %v1515
        %v1517 = vpop.f32.mrb[0].mxu0
        %1518 = vmatprep.mubr.bf16.mxu0 0
        %1519 = vmatmul.mubr.bf16.gmra.mrb[0].mxu0 %v1301
        %v1520 = vpop.f32.mrb[0].mxu0
        %v1521 = vadd.f32 0.0, %v1520
        %v1522 = vpop.f32.mrb[0].mxu0
        %v1523 = vpop.f32.mrb[0].mxu0
        %v1524 = vadd.f32 0.0, %v1523
        %v1525 = vpop.f32.mrb[0].mxu0
        %1526 = vdwg.mxu0
        %1527 = vadd.xlane.f32.xlu0 %v1401
        %v1528 = vpop.xlane.xlu0 %1527
        %1529 = vadd.xlane.f32.xlu0 %v1404
        %v1530 = vpop.xlane.xlu0 %1529
        %1531 = vadd.xlane.f32.xlu0 %v1409
        %v1532 = vpop.xlane.xlu0 %1531
        %1533 = vadd.xlane.f32.xlu0 %v1412
        %v1534 = vpop.xlane.xlu0 %1533
        %1535 = vadd.xlane.f32.xlu0 %v1417
        %v1536 = vpop.xlane.xlu0 %1535
        %1537 = vadd.xlane.f32.xlu0 %v1420
        %v1538 = vpop.xlane.xlu0 %1537
        %1539 = vadd.xlane.f32.xlu0 %v1425
        %v1540 = vpop.xlane.xlu0 %1539
        %1541 = vadd.xlane.f32.xlu0 %v1428
        %v1542 = vpop.xlane.xlu0 %1541
        %1543 = vadd.xlane.f32.xlu0 %v1433
        %v1544 = vpop.xlane.xlu0 %1543
        %1545 = vadd.xlane.f32.xlu0 %v1436
        %v1546 = vpop.xlane.xlu0 %1545
        %1547 = vadd.xlane.f32.xlu0 %v1441
        %v1548 = vpop.xlane.xlu0 %1547
        %1549 = vadd.xlane.f32.xlu0 %v1444
        %v1550 = vpop.xlane.xlu0 %1549
        %1551 = vadd.xlane.f32.xlu0 %v1449
        %v1552 = vpop.xlane.xlu0 %1551
        %1553 = vadd.xlane.f32.xlu0 %v1452
        %v1554 = vpop.xlane.xlu0 %1553
        %1555 = vadd.xlane.f32.xlu0 %v1457
        %v1556 = vpop.xlane.xlu0 %1555
        %1557 = vadd.xlane.f32.xlu0 %v1460
        %v1558 = vpop.xlane.xlu0 %1557
        %1559 = vadd.xlane.f32.xlu0 %v1465
        %v1560 = vpop.xlane.xlu0 %1559
        %1561 = vadd.xlane.f32.xlu0 %v1468
        %v1562 = vpop.xlane.xlu0 %1561
        %1563 = vadd.xlane.f32.xlu0 %v1473
        %v1564 = vpop.xlane.xlu0 %1563
        %1565 = vadd.xlane.f32.xlu0 %v1476
        %v1566 = vpop.xlane.xlu0 %1565
        %1567 = vadd.xlane.f32.xlu0 %v1481
        %v1568 = vpop.xlane.xlu0 %1567
        %1569 = vadd.xlane.f32.xlu0 %v1484
        %v1570 = vpop.xlane.xlu0 %1569
        %1571 = vadd.xlane.f32.xlu0 %v1489
        %v1572 = vpop.xlane.xlu0 %1571
        %1573 = vadd.xlane.f32.xlu0 %v1492
        %v1574 = vpop.xlane.xlu0 %1573
        %1575 = vadd.xlane.f32.xlu0 %v1497
        %v1576 = vpop.xlane.xlu0 %1575
        %1577 = vadd.xlane.f32.xlu0 %v1500
        %v1578 = vpop.xlane.xlu0 %1577
        %1579 = vadd.xlane.f32.xlu0 %v1505
        %v1580 = vpop.xlane.xlu0 %1579
        %1581 = vadd.xlane.f32.xlu0 %v1508
        %v1582 = vpop.xlane.xlu0 %1581
        %1583 = vadd.xlane.f32.xlu0 %v1513
        %v1584 = vpop.xlane.xlu0 %1583
        %1585 = vadd.xlane.f32.xlu0 %v1516
        %v1586 = vpop.xlane.xlu0 %1585
        %1587 = vadd.xlane.f32.xlu0 %v1521
        %v1588 = vpop.xlane.xlu0 %1587
        %1589 = vadd.xlane.f32.xlu0 %v1524
        %v1590 = vpop.xlane.xlu0 %1589
        %v1591 = vmul.f32 %v1528, 0.0078125
        %v1592 = vmul.f32 %v1530, 0.0078125
        %v1593 = vmul.f32 %v1532, 0.0078125
        %v1594 = vmul.f32 %v1534, 0.0078125
        %v1595 = vmul.f32 %v1536, 0.0078125
        %v1596 = vmul.f32 %v1538, 0.0078125
        %v1597 = vmul.f32 %v1540, 0.0078125
        %v1598 = vmul.f32 %v1542, 0.0078125
        %v1599 = vmul.f32 %v1544, 0.0078125
        %v1600 = vmul.f32 %v1546, 0.0078125
        %v1601 = vmul.f32 %v1548, 0.0078125
        %v1602 = vmul.f32 %v1550, 0.0078125
        %v1603 = vmul.f32 %v1552, 0.0078125
        %v1604 = vmul.f32 %v1554, 0.0078125
        %v1605 = vmul.f32 %v1556, 0.0078125
        %v1606 = vmul.f32 %v1558, 0.0078125
        %v1607 = vmul.f32 %v1560, 0.0078125
        %v1608 = vmul.f32 %v1562, 0.0078125
        %v1609 = vmul.f32 %v1564, 0.0078125
        %v1610 = vmul.f32 %v1566, 0.0078125
        %v1611 = vmul.f32 %v1568, 0.0078125
        %v1612 = vmul.f32 %v1570, 0.0078125
        %v1613 = vmul.f32 %v1572, 0.0078125
        %v1614 = vmul.f32 %v1574, 0.0078125
        %v1615 = vmul.f32 %v1576, 0.0078125
        %v1616 = vmul.f32 %v1578, 0.0078125
        %v1617 = vmul.f32 %v1580, 0.0078125
        %v1618 = vmul.f32 %v1582, 0.0078125
        %v1619 = vmul.f32 %v1584, 0.0078125
        %v1620 = vmul.f32 %v1586, 0.0078125
        %v1621 = vmul.f32 %v1588, 0.0078125
        %v1622 = vmul.f32 %v1590, 0.0078125
        %v1623 = vmul.f32 %v1401, %v1401
        %v1624 = vmul.f32 %v1404, %v1404
        %v1625 = vmul.f32 %v1409, %v1409
        %v1626 = vmul.f32 %v1412, %v1412
        %v1627 = vmul.f32 %v1417, %v1417
        %v1628 = vmul.f32 %v1420, %v1420
        %v1629 = vmul.f32 %v1425, %v1425
        %v1630 = vmul.f32 %v1428, %v1428
        %v1631 = vmul.f32 %v1433, %v1433
        %v1632 = vmul.f32 %v1436, %v1436
        %v1633 = vmul.f32 %v1441, %v1441
        %v1634 = vmul.f32 %v1444, %v1444
        %v1635 = vmul.f32 %v1449, %v1449
        %v1636 = vmul.f32 %v1452, %v1452
        %v1637 = vmul.f32 %v1457, %v1457
        %v1638 = vmul.f32 %v1460, %v1460
        %v1639 = vmul.f32 %v1465, %v1465
        %v1640 = vmul.f32 %v1468, %v1468
        %v1641 = vmul.f32 %v1473, %v1473
        %v1642 = vmul.f32 %v1476, %v1476
        %v1643 = vmul.f32 %v1481, %v1481
        %v1644 = vmul.f32 %v1484, %v1484
        %v1645 = vmul.f32 %v1489, %v1489
        %v1646 = vmul.f32 %v1492, %v1492
        %v1647 = vmul.f32 %v1497, %v1497
        %v1648 = vmul.f32 %v1500, %v1500
        %v1649 = vmul.f32 %v1505, %v1505
        %v1650 = vmul.f32 %v1508, %v1508
        %v1651 = vmul.f32 %v1513, %v1513
        %v1652 = vmul.f32 %v1516, %v1516
        %v1653 = vmul.f32 %v1521, %v1521
        %v1654 = vmul.f32 %v1524, %v1524
        %1655 = vadd.xlane.f32.xlu0 %v1623
        %v1656 = vpop.xlane.xlu0 %1655
        %1657 = vadd.xlane.f32.xlu0 %v1624
        %v1658 = vpop.xlane.xlu0 %1657
        %1659 = vadd.xlane.f32.xlu0 %v1625
        %v1660 = vpop.xlane.xlu0 %1659
        %1661 = vadd.xlane.f32.xlu0 %v1626
        %v1662 = vpop.xlane.xlu0 %1661
        %1663 = vadd.xlane.f32.xlu0 %v1627
        %v1664 = vpop.xlane.xlu0 %1663
        %1665 = vadd.xlane.f32.xlu0 %v1628
        %v1666 = vpop.xlane.xlu0 %1665
        %1667 = vadd.xlane.f32.xlu0 %v1629
        %v1668 = vpop.xlane.xlu0 %1667
        %1669 = vadd.xlane.f32.xlu0 %v1630
        %v1670 = vpop.xlane.xlu0 %1669
        %1671 = vadd.xlane.f32.xlu0 %v1631
        %v1672 = vpop.xlane.xlu0 %1671
        %1673 = vadd.xlane.f32.xlu0 %v1632
        %v1674 = vpop.xlane.xlu0 %1673
        %1675 = vadd.xlane.f32.xlu0 %v1633
        %v1676 = vpop.xlane.xlu0 %1675
        %1677 = vadd.xlane.f32.xlu0 %v1634
        %v1678 = vpop.xlane.xlu0 %1677
        %1679 = vadd.xlane.f32.xlu0 %v1635
        %v1680 = vpop.xlane.xlu0 %1679
        %1681 = vadd.xlane.f32.xlu0 %v1636
        %v1682 = vpop.xlane.xlu0 %1681
        %1683 = vadd.xlane.f32.xlu0 %v1637
        %v1684 = vpop.xlane.xlu0 %1683
        %1685 = vadd.xlane.f32.xlu0 %v1638
        %v1686 = vpop.xlane.xlu0 %1685
        %1687 = vadd.xlane.f32.xlu0 %v1639
        %v1688 = vpop.xlane.xlu0 %1687
        %1689 = vadd.xlane.f32.xlu0 %v1640
        %v1690 = vpop.xlane.xlu0 %1689
        %1691 = vadd.xlane.f32.xlu0 %v1641
        %v1692 = vpop.xlane.xlu0 %1691
        %1693 = vadd.xlane.f32.xlu0 %v1642
        %v1694 = vpop.xlane.xlu0 %1693
        %1695 = vadd.xlane.f32.xlu0 %v1643
        %v1696 = vpop.xlane.xlu0 %1695
        %1697 = vadd.xlane.f32.xlu0 %v1644
        %v1698 = vpop.xlane.xlu0 %1697
        %1699 = vadd.xlane.f32.xlu0 %v1645
        %v1700 = vpop.xlane.xlu0 %1699
        %1701 = vadd.xlane.f32.xlu0 %v1646
        %v1702 = vpop.xlane.xlu0 %1701
        %1703 = vadd.xlane.f32.xlu0 %v1647
        %v1704 = vpop.xlane.xlu0 %1703
        %1705 = vadd.xlane.f32.xlu0 %v1648
        %v1706 = vpop.xlane.xlu0 %1705
        %1707 = vadd.xlane.f32.xlu0 %v1649
        %v1708 = vpop.xlane.xlu0 %1707
        %1709 = vadd.xlane.f32.xlu0 %v1650
        %v1710 = vpop.xlane.xlu0 %1709
        %1711 = vadd.xlane.f32.xlu0 %v1651
        %v1712 = vpop.xlane.xlu0 %1711
        %1713 = vadd.xlane.f32.xlu0 %v1652
        %v1714 = vpop.xlane.xlu0 %1713
        %1715 = vadd.xlane.f32.xlu0 %v1653
        %v1716 = vpop.xlane.xlu0 %1715
        %1717 = vadd.xlane.f32.xlu0 %v1654
        %v1718 = vpop.xlane.xlu0 %1717
        %v1719 = vmul.f32 %v1656, 0.0078125
        %v1720 = vmul.f32 %v1658, 0.0078125
        %v1721 = vmul.f32 %v1660, 0.0078125
        %v1722 = vmul.f32 %v1662, 0.0078125
        %v1723 = vmul.f32 %v1664, 0.0078125
        %v1724 = vmul.f32 %v1666, 0.0078125
        %v1725 = vmul.f32 %v1668, 0.0078125
        %v1726 = vmul.f32 %v1670, 0.0078125
        %v1727 = vmul.f32 %v1672, 0.0078125
        %v1728 = vmul.f32 %v1674, 0.0078125
        %v1729 = vmul.f32 %v1676, 0.0078125
        %v1730 = vmul.f32 %v1678, 0.0078125
        %v1731 = vmul.f32 %v1680, 0.0078125
        %v1732 = vmul.f32 %v1682, 0.0078125
        %v1733 = vmul.f32 %v1684, 0.0078125
        %v1734 = vmul.f32 %v1686, 0.0078125
        %v1735 = vmul.f32 %v1688, 0.0078125
        %v1736 = vmul.f32 %v1690, 0.0078125
        %v1737 = vmul.f32 %v1692, 0.0078125
        %v1738 = vmul.f32 %v1694, 0.0078125
        %v1739 = vmul.f32 %v1696, 0.0078125
        %v1740 = vmul.f32 %v1698, 0.0078125
        %v1741 = vmul.f32 %v1700, 0.0078125
        %v1742 = vmul.f32 %v1702, 0.0078125
        %v1743 = vmul.f32 %v1704, 0.0078125
        %v1744 = vmul.f32 %v1706, 0.0078125
        %v1745 = vmul.f32 %v1708, 0.0078125
        %v1746 = vmul.f32 %v1710, 0.0078125
        %v1747 = vmul.f32 %v1712, 0.0078125
        %v1748 = vmul.f32 %v1714, 0.0078125
        %v1749 = vmul.f32 %v1716, 0.0078125
        %v1750 = vmul.f32 %v1718, 0.0078125
        %v1751 = vmul.f32 %v1591, %v1591
        %v1752 = vmul.f32 %v1592, %v1592
        %v1753 = vmul.f32 %v1593, %v1593
        %v1754 = vmul.f32 %v1594, %v1594
        %v1755 = vmul.f32 %v1595, %v1595
        %v1756 = vmul.f32 %v1596, %v1596
        %v1757 = vmul.f32 %v1597, %v1597
        %v1758 = vmul.f32 %v1598, %v1598
        %v1759 = vmul.f32 %v1599, %v1599
        %v1760 = vmul.f32 %v1600, %v1600
        %v1761 = vmul.f32 %v1601, %v1601
        %v1762 = vmul.f32 %v1602, %v1602
        %v1763 = vmul.f32 %v1603, %v1603
        %v1764 = vmul.f32 %v1604, %v1604
        %v1765 = vmul.f32 %v1605, %v1605
        %v1766 = vmul.f32 %v1606, %v1606
        %v1767 = vmul.f32 %v1607, %v1607
        %v1768 = vmul.f32 %v1608, %v1608
        %v1769 = vmul.f32 %v1609, %v1609
        %v1770 = vmul.f32 %v1610, %v1610
        %v1771 = vmul.f32 %v1611, %v1611
        %v1772 = vmul.f32 %v1612, %v1612
        %v1773 = vmul.f32 %v1613, %v1613
        %v1774 = vmul.f32 %v1614, %v1614
        %v1775 = vmul.f32 %v1615, %v1615
        %v1776 = vmul.f32 %v1616, %v1616
        %v1777 = vmul.f32 %v1617, %v1617
        %v1778 = vmul.f32 %v1618, %v1618
        %v1779 = vmul.f32 %v1619, %v1619
        %v1780 = vmul.f32 %v1620, %v1620
        %v1781 = vmul.f32 %v1621, %v1621
        %v1782 = vmul.f32 %v1622, %v1622
        %v1783 = vsub.f32 %v1719, %v1751
        %v1784 = vsub.f32 %v1720, %v1752
        %v1785 = vsub.f32 %v1721, %v1753
        %v1786 = vsub.f32 %v1722, %v1754
        %v1787 = vsub.f32 %v1723, %v1755
        %v1788 = vsub.f32 %v1724, %v1756
        %v1789 = vsub.f32 %v1725, %v1757
        %v1790 = vsub.f32 %v1726, %v1758
        %v1791 = vsub.f32 %v1727, %v1759
        %v1792 = vsub.f32 %v1728, %v1760
        %v1793 = vsub.f32 %v1729, %v1761
        %v1794 = vsub.f32 %v1730, %v1762
        %v1795 = vsub.f32 %v1731, %v1763
        %v1796 = vsub.f32 %v1732, %v1764
        %v1797 = vsub.f32 %v1733, %v1765
        %v1798 = vsub.f32 %v1734, %v1766
        %v1799 = vsub.f32 %v1735, %v1767
        %v1800 = vsub.f32 %v1736, %v1768
        %v1801 = vsub.f32 %v1737, %v1769
        %v1802 = vsub.f32 %v1738, %v1770
        %v1803 = vsub.f32 %v1739, %v1771
        %v1804 = vsub.f32 %v1740, %v1772
        %v1805 = vsub.f32 %v1741, %v1773
        %v1806 = vsub.f32 %v1742, %v1774
        %v1807 = vsub.f32 %v1743, %v1775
        %v1808 = vsub.f32 %v1744, %v1776
        %v1809 = vsub.f32 %v1745, %v1777
        %v1810 = vsub.f32 %v1746, %v1778
        %v1811 = vsub.f32 %v1747, %v1779
        %v1812 = vsub.f32 %v1748, %v1780
        %v1813 = vsub.f32 %v1749, %v1781
        %v1814 = vsub.f32 %v1750, %v1782
        %v1815 = vmax.f32 %v1783, 0.0
        %v1816 = vmax.f32 %v1784, 0.0
        %v1817 = vmax.f32 %v1785, 0.0
        %v1818 = vmax.f32 %v1786, 0.0
        %v1819 = vmax.f32 %v1787, 0.0
        %v1820 = vmax.f32 %v1788, 0.0
        %v1821 = vmax.f32 %v1789, 0.0
        %v1822 = vmax.f32 %v1790, 0.0
        %v1823 = vmax.f32 %v1791, 0.0
        %v1824 = vmax.f32 %v1792, 0.0
        %v1825 = vmax.f32 %v1793, 0.0
        %v1826 = vmax.f32 %v1794, 0.0
        %v1827 = vmax.f32 %v1795, 0.0
        %v1828 = vmax.f32 %v1796, 0.0
        %v1829 = vmax.f32 %v1797, 0.0
        %v1830 = vmax.f32 %v1798, 0.0
        %v1831 = vmax.f32 %v1799, 0.0
        %v1832 = vmax.f32 %v1800, 0.0
        %v1833 = vmax.f32 %v1801, 0.0
        %v1834 = vmax.f32 %v1802, 0.0
        %v1835 = vmax.f32 %v1803, 0.0
        %v1836 = vmax.f32 %v1804, 0.0
        %v1837 = vmax.f32 %v1805, 0.0
        %v1838 = vmax.f32 %v1806, 0.0
        %v1839 = vmax.f32 %v1807, 0.0
        %v1840 = vmax.f32 %v1808, 0.0
        %v1841 = vmax.f32 %v1809, 0.0
        %v1842 = vmax.f32 %v1810, 0.0
        %v1843 = vmax.f32 %v1811, 0.0
        %v1844 = vmax.f32 %v1812, 0.0
        %v1845 = vmax.f32 %v1813, 0.0
        %v1846 = vmax.f32 %v1814, 0.0
        %v1847 = vsub.f32 %v1401, %v1591
        %v1848 = vsub.f32 %v1404, %v1592
        %v1849 = vsub.f32 %v1409, %v1593
        %v1850 = vsub.f32 %v1412, %v1594
        %v1851 = vsub.f32 %v1417, %v1595
        %v1852 = vsub.f32 %v1420, %v1596
        %v1853 = vsub.f32 %v1425, %v1597
        %v1854 = vsub.f32 %v1428, %v1598
        %v1855 = vsub.f32 %v1433, %v1599
        %v1856 = vsub.f32 %v1436, %v1600
        %v1857 = vsub.f32 %v1441, %v1601
        %v1858 = vsub.f32 %v1444, %v1602
        %v1859 = vsub.f32 %v1449, %v1603
        %v1860 = vsub.f32 %v1452, %v1604
        %v1861 = vsub.f32 %v1457, %v1605
        %v1862 = vsub.f32 %v1460, %v1606
        %v1863 = vsub.f32 %v1465, %v1607
        %v1864 = vsub.f32 %v1468, %v1608
        %v1865 = vsub.f32 %v1473, %v1609
        %v1866 = vsub.f32 %v1476, %v1610
        %v1867 = vsub.f32 %v1481, %v1611
        %v1868 = vsub.f32 %v1484, %v1612
        %v1869 = vsub.f32 %v1489, %v1613
        %v1870 = vsub.f32 %v1492, %v1614
        %v1871 = vsub.f32 %v1497, %v1615
        %v1872 = vsub.f32 %v1500, %v1616
        %v1873 = vsub.f32 %v1505, %v1617
        %v1874 = vsub.f32 %v1508, %v1618
        %v1875 = vsub.f32 %v1513, %v1619
        %v1876 = vsub.f32 %v1516, %v1620
        %v1877 = vsub.f32 %v1521, %v1621
        %v1878 = vsub.f32 %v1524, %v1622
        %v1879 = vadd.f32 %v1815, 1e-05
        %v1880 = vadd.f32 %v1816, 1e-05
        %v1881 = vadd.f32 %v1817, 1e-05
        %v1882 = vadd.f32 %v1818, 1e-05
        %v1883 = vadd.f32 %v1819, 1e-05
        %v1884 = vadd.f32 %v1820, 1e-05
        %v1885 = vadd.f32 %v1821, 1e-05
        %v1886 = vadd.f32 %v1822, 1e-05
        %v1887 = vadd.f32 %v1823, 1e-05
        %v1888 = vadd.f32 %v1824, 1e-05
        %v1889 = vadd.f32 %v1825, 1e-05
        %v1890 = vadd.f32 %v1826, 1e-05
        %v1891 = vadd.f32 %v1827, 1e-05
        %v1892 = vadd.f32 %v1828, 1e-05
        %v1893 = vadd.f32 %v1829, 1e-05
        %v1894 = vadd.f32 %v1830, 1e-05
        %v1895 = vadd.f32 %v1831, 1e-05
        %v1896 = vadd.f32 %v1832, 1e-05
        %v1897 = vadd.f32 %v1833, 1e-05
        %v1898 = vadd.f32 %v1834, 1e-05
        %v1899 = vadd.f32 %v1835, 1e-05
        %v1900 = vadd.f32 %v1836, 1e-05
        %v1901 = vadd.f32 %v1837, 1e-05
        %v1902 = vadd.f32 %v1838, 1e-05
        %v1903 = vadd.f32 %v1839, 1e-05
        %v1904 = vadd.f32 %v1840, 1e-05
        %v1905 = vadd.f32 %v1841, 1e-05
        %v1906 = vadd.f32 %v1842, 1e-05
        %v1907 = vadd.f32 %v1843, 1e-05
        %v1908 = vadd.f32 %v1844, 1e-05
        %v1909 = vadd.f32 %v1845, 1e-05
        %v1910 = vadd.f32 %v1846, 1e-05
        %v1911 = vrsqrt.pop %v1879
        %v1912 = vrsqrt.pop %v1880
        %v1913 = vrsqrt.pop %v1881
        %v1914 = vrsqrt.pop %v1882
        %v1915 = vrsqrt.pop %v1883
        %v1916 = vrsqrt.pop %v1884
        %v1917 = vrsqrt.pop %v1885
        %v1918 = vrsqrt.pop %v1886
        %v1919 = vrsqrt.pop %v1887
        %v1920 = vrsqrt.pop %v1888
        %v1921 = vrsqrt.pop %v1889
        %v1922 = vrsqrt.pop %v1890
        %v1923 = vrsqrt.pop %v1891
        %v1924 = vrsqrt.pop %v1892
        %v1925 = vrsqrt.pop %v1893
        %v1926 = vrsqrt.pop %v1894
        %v1927 = vrsqrt.pop %v1895
        %v1928 = vrsqrt.pop %v1896
        %v1929 = vrsqrt.pop %v1897
        %v1930 = vrsqrt.pop %v1898
        %v1931 = vrsqrt.pop %v1899
        %v1932 = vrsqrt.pop %v1900
        %v1933 = vrsqrt.pop %v1901
        %v1934 = vrsqrt.pop %v1902
        %v1935 = vrsqrt.pop %v1903
        %v1936 = vrsqrt.pop %v1904
        %v1937 = vrsqrt.pop %v1905
        %v1938 = vrsqrt.pop %v1906
        %v1939 = vrsqrt.pop %v1907
        %v1940 = vrsqrt.pop %v1908
        %v1941 = vrsqrt.pop %v1909
        %v1942 = vrsqrt.pop %v1910
        %v1943 = vmul.f32 %v1847, %v1911
        %v1944 = vmul.f32 %v1848, %v1912
        %v1945 = vmul.f32 %v1849, %v1913
        %v1946 = vmul.f32 %v1850, %v1914
        %v1947 = vmul.f32 %v1851, %v1915
        %v1948 = vmul.f32 %v1852, %v1916
        %v1949 = vmul.f32 %v1853, %v1917
        %v1950 = vmul.f32 %v1854, %v1918
        %v1951 = vmul.f32 %v1855, %v1919
        %v1952 = vmul.f32 %v1856, %v1920
        %v1953 = vmul.f32 %v1857, %v1921
        %v1954 = vmul.f32 %v1858, %v1922
        %v1955 = vmul.f32 %v1859, %v1923
        %v1956 = vmul.f32 %v1860, %v1924
        %v1957 = vmul.f32 %v1861, %v1925
        %v1958 = vmul.f32 %v1862, %v1926
        %v1959 = vmul.f32 %v1863, %v1927
        %v1960 = vmul.f32 %v1864, %v1928
        %v1961 = vmul.f32 %v1865, %v1929
        %v1962 = vmul.f32 %v1866, %v1930
        %v1963 = vmul.f32 %v1867, %v1931
        %v1964 = vmul.f32 %v1868, %v1932
        %v1965 = vmul.f32 %v1869, %v1933
        %v1966 = vmul.f32 %v1870, %v1934
        %v1967 = vmul.f32 %v1871, %v1935
        %v1968 = vmul.f32 %v1872, %v1936
        %v1969 = vmul.f32 %v1873, %v1937
        %v1970 = vmul.f32 %v1874, %v1938
        %v1971 = vmul.f32 %v1875, %v1939
        %v1972 = vmul.f32 %v1876, %v1940
        %v1973 = vmul.f32 %v1877, %v1941
        %v1974 = vmul.f32 %v1878, %v1942
        %v1975 = vlaneseq
        %v1976 = vshrl.u32 %v1975, 7
        %v1977 = vsub.s32 3, %v1976
        %v1978 = vrot.slane %v312, %v1977
        %v1979 = vmul.f32 %v1943, %v1978
        %v1980 = vmul.f32 %v1944, %v1978
        %v1981 = vmul.f32 %v1945, %v1978
        %v1982 = vmul.f32 %v1946, %v1978
        %v1983 = vmul.f32 %v1947, %v1978
        %v1984 = vmul.f32 %v1948, %v1978
        %v1985 = vmul.f32 %v1949, %v1978
        %v1986 = vmul.f32 %v1950, %v1978
        %v1987 = vmul.f32 %v1951, %v1978
        %v1988 = vmul.f32 %v1952, %v1978
        %v1989 = vmul.f32 %v1953, %v1978
        %v1990 = vmul.f32 %v1954, %v1978
        %v1991 = vmul.f32 %v1955, %v1978
        %v1992 = vmul.f32 %v1956, %v1978
        %v1993 = vmul.f32 %v1957, %v1978
        %v1994 = vmul.f32 %v1958, %v1978
        %v1995 = vmul.f32 %v1959, %v1978
        %v1996 = vmul.f32 %v1960, %v1978
        %v1997 = vmul.f32 %v1961, %v1978
        %v1998 = vmul.f32 %v1962, %v1978
        %v1999 = vmul.f32 %v1963, %v1978
        %v2000 = vmul.f32 %v1964, %v1978
        %v2001 = vmul.f32 %v1965, %v1978
        %v2002 = vmul.f32 %v1966, %v1978
        %v2003 = vmul.f32 %v1967, %v1978
        %v2004 = vmul.f32 %v1968, %v1978
        %v2005 = vmul.f32 %v1969, %v1978
        %v2006 = vmul.f32 %v1970, %v1978
        %v2007 = vmul.f32 %v1971, %v1978
        %v2008 = vmul.f32 %v1972, %v1978
        %v2009 = vmul.f32 %v1973, %v1978
        %v2010 = vmul.f32 %v1974, %v1978
        %v2011 = vlaneseq
        %v2012 = vshrl.u32 %v2011, 7
        %v2013 = vsub.s32 4, %v2012
        %v2014 = vrot.slane %v312, %v2013
        %v2015 = vadd.f32 %v1979, %v2014
        %v2016 = vadd.f32 %v1980, %v2014
        %v2017 = vadd.f32 %v1981, %v2014
        %v2018 = vadd.f32 %v1982, %v2014
        %v2019 = vadd.f32 %v1983, %v2014
        %v2020 = vadd.f32 %v1984, %v2014
        %v2021 = vadd.f32 %v1985, %v2014
        %v2022 = vadd.f32 %v1986, %v2014
        %v2023 = vadd.f32 %v1987, %v2014
        %v2024 = vadd.f32 %v1988, %v2014
        %v2025 = vadd.f32 %v1989, %v2014
        %v2026 = vadd.f32 %v1990, %v2014
        %v2027 = vadd.f32 %v1991, %v2014
        %v2028 = vadd.f32 %v1992, %v2014
        %v2029 = vadd.f32 %v1993, %v2014
        %v2030 = vadd.f32 %v1994, %v2014
        %v2031 = vadd.f32 %v1995, %v2014
        %v2032 = vadd.f32 %v1996, %v2014
        %v2033 = vadd.f32 %v1997, %v2014
        %v2034 = vadd.f32 %v1998, %v2014
        %v2035 = vadd.f32 %v1999, %v2014
        %v2036 = vadd.f32 %v2000, %v2014
        %v2037 = vadd.f32 %v2001, %v2014
        %v2038 = vadd.f32 %v2002, %v2014
        %v2039 = vadd.f32 %v2003, %v2014
        %v2040 = vadd.f32 %v2004, %v2014
        %v2041 = vadd.f32 %v2005, %v2014
        %v2042 = vadd.f32 %v2006, %v2014
        %v2043 = vadd.f32 %v2007, %v2014
        %v2044 = vadd.f32 %v2008, %v2014
        %v2045 = vadd.f32 %v2009, %v2014
        %v2046 = vadd.f32 %v2010, %v2014
        %v2047 = vadd.f32 %v2015, %v280
        %v2048 = vadd.f32 %v2016, %v281
        %v2049 = vadd.f32 %v2017, %v282
        %v2050 = vadd.f32 %v2018, %v283
        %v2051 = vadd.f32 %v2019, %v284
        %v2052 = vadd.f32 %v2020, %v285
        %v2053 = vadd.f32 %v2021, %v286
        %v2054 = vadd.f32 %v2022, %v287
        %v2055 = vadd.f32 %v2023, %v288
        %v2056 = vadd.f32 %v2024, %v289
        %v2057 = vadd.f32 %v2025, %v290
        %v2058 = vadd.f32 %v2026, %v291
        %v2059 = vadd.f32 %v2027, %v292
        %v2060 = vadd.f32 %v2028, %v293
        %v2061 = vadd.f32 %v2029, %v294
        %v2062 = vadd.f32 %v2030, %v295
        %v2063 = vadd.f32 %v2031, %v296
        %v2064 = vadd.f32 %v2032, %v297
        %v2065 = vadd.f32 %v2033, %v298
        %v2066 = vadd.f32 %v2034, %v299
        %v2067 = vadd.f32 %v2035, %v300
        %v2068 = vadd.f32 %v2036, %v301
        %v2069 = vadd.f32 %v2037, %v302
        %v2070 = vadd.f32 %v2038, %v303
        %v2071 = vadd.f32 %v2039, %v304
        %v2072 = vadd.f32 %v2040, %v305
        %v2073 = vadd.f32 %v2041, %v306
        %v2074 = vadd.f32 %v2042, %v307
        %v2075 = vadd.f32 %v2043, %v308
        %v2076 = vadd.f32 %v2044, %v309
        %v2077 = vadd.f32 %v2045, %v310
        %v2078 = vadd.f32 %v2046, %v311
        %v2079 = vmul.f32 %v2047, 0.5
        %v2080 = vmul.f32 %v2048, 0.5
        %v2081 = vmul.f32 %v2049, 0.5
        %v2082 = vmul.f32 %v2050, 0.5
        %v2083 = vmul.f32 %v2051, 0.5
        %v2084 = vmul.f32 %v2052, 0.5
        %v2085 = vmul.f32 %v2053, 0.5
        %v2086 = vmul.f32 %v2054, 0.5
        %v2087 = vmul.f32 %v2055, 0.5
        %v2088 = vmul.f32 %v2056, 0.5
        %v2089 = vmul.f32 %v2057, 0.5
        %v2090 = vmul.f32 %v2058, 0.5
        %v2091 = vmul.f32 %v2059, 0.5
        %v2092 = vmul.f32 %v2060, 0.5
        %v2093 = vmul.f32 %v2061, 0.5
        %v2094 = vmul.f32 %v2062, 0.5
        %v2095 = vmul.f32 %v2063, 0.5
        %v2096 = vmul.f32 %v2064, 0.5
        %v2097 = vmul.f32 %v2065, 0.5
        %v2098 = vmul.f32 %v2066, 0.5
        %v2099 = vmul.f32 %v2067, 0.5
        %v2100 = vmul.f32 %v2068, 0.5
        %v2101 = vmul.f32 %v2069, 0.5
        %v2102 = vmul.f32 %v2070, 0.5
        %v2103 = vmul.f32 %v2071, 0.5
        %v2104 = vmul.f32 %v2072, 0.5
        %v2105 = vmul.f32 %v2073, 0.5
        %v2106 = vmul.f32 %v2074, 0.5
        %v2107 = vmul.f32 %v2075, 0.5
        %v2108 = vmul.f32 %v2076, 0.5
        %v2109 = vmul.f32 %v2077, 0.5
        %v2110 = vmul.f32 %v2078, 0.5
        %v2111 = vtanh.pop %v2079
        %v2112 = vtanh.pop %v2080
        %v2113 = vtanh.pop %v2081
        %v2114 = vtanh.pop %v2082
        %v2115 = vtanh.pop %v2083
        %v2116 = vtanh.pop %v2084
        %v2117 = vtanh.pop %v2085
        %v2118 = vtanh.pop %v2086
        %v2119 = vtanh.pop %v2087
        %v2120 = vtanh.pop %v2088
        %v2121 = vtanh.pop %v2089
        %v2122 = vtanh.pop %v2090
        %v2123 = vtanh.pop %v2091
        %v2124 = vtanh.pop %v2092
        %v2125 = vtanh.pop %v2093
        %v2126 = vtanh.pop %v2094
        %v2127 = vtanh.pop %v2095
        %v2128 = vtanh.pop %v2096
        %v2129 = vtanh.pop %v2097
        %v2130 = vtanh.pop %v2098
        %v2131 = vtanh.pop %v2099
        %v2132 = vtanh.pop %v2100
        %v2133 = vtanh.pop %v2101
        %v2134 = vtanh.pop %v2102
        %v2135 = vtanh.pop %v2103
        %v2136 = vtanh.pop %v2104
        %v2137 = vtanh.pop %v2105
        %v2138 = vtanh.pop %v2106
        %v2139 = vtanh.pop %v2107
        %v2140 = vtanh.pop %v2108
        %v2141 = vtanh.pop %v2109
        %v2142 = vtanh.pop %v2110
        %v2143 = vadd.f32 %v2111, 1.0
        %v2144 = vadd.f32 %v2112, 1.0
        %v2145 = vadd.f32 %v2113, 1.0
        %v2146 = vadd.f32 %v2114, 1.0
        %v2147 = vadd.f32 %v2115, 1.0
        %v2148 = vadd.f32 %v2116, 1.0
        %v2149 = vadd.f32 %v2117, 1.0
        %v2150 = vadd.f32 %v2118, 1.0
        %v2151 = vadd.f32 %v2119, 1.0
        %v2152 = vadd.f32 %v2120, 1.0
        %v2153 = vadd.f32 %v2121, 1.0
        %v2154 = vadd.f32 %v2122, 1.0
        %v2155 = vadd.f32 %v2123, 1.0
        %v2156 = vadd.f32 %v2124, 1.0
        %v2157 = vadd.f32 %v2125, 1.0
        %v2158 = vadd.f32 %v2126, 1.0
        %v2159 = vadd.f32 %v2127, 1.0
        %v2160 = vadd.f32 %v2128, 1.0
        %v2161 = vadd.f32 %v2129, 1.0
        %v2162 = vadd.f32 %v2130, 1.0
        %v2163 = vadd.f32 %v2131, 1.0
        %v2164 = vadd.f32 %v2132, 1.0
        %v2165 = vadd.f32 %v2133, 1.0
        %v2166 = vadd.f32 %v2134, 1.0
        %v2167 = vadd.f32 %v2135, 1.0
        %v2168 = vadd.f32 %v2136, 1.0
        %v2169 = vadd.f32 %v2137, 1.0
        %v2170 = vadd.f32 %v2138, 1.0
        %v2171 = vadd.f32 %v2139, 1.0
        %v2172 = vadd.f32 %v2140, 1.0
        %v2173 = vadd.f32 %v2141, 1.0
        %v2174 = vadd.f32 %v2142, 1.0
        %v2175 = vmul.f32 %v2079, %v2143
        %v2176 = vmul.f32 %v2080, %v2144
        %v2177 = vmul.f32 %v2081, %v2145
        %v2178 = vmul.f32 %v2082, %v2146
        %v2179 = vmul.f32 %v2083, %v2147
        %v2180 = vmul.f32 %v2084, %v2148
        %v2181 = vmul.f32 %v2085, %v2149
        %v2182 = vmul.f32 %v2086, %v2150
        %v2183 = vmul.f32 %v2087, %v2151
        %v2184 = vmul.f32 %v2088, %v2152
        %v2185 = vmul.f32 %v2089, %v2153
        %v2186 = vmul.f32 %v2090, %v2154
        %v2187 = vmul.f32 %v2091, %v2155
        %v2188 = vmul.f32 %v2092, %v2156
        %v2189 = vmul.f32 %v2093, %v2157
        %v2190 = vmul.f32 %v2094, %v2158
        %v2191 = vmul.f32 %v2095, %v2159
        %v2192 = vmul.f32 %v2096, %v2160
        %v2193 = vmul.f32 %v2097, %v2161
        %v2194 = vmul.f32 %v2098, %v2162
        %v2195 = vmul.f32 %v2099, %v2163
        %v2196 = vmul.f32 %v2100, %v2164
        %v2197 = vmul.f32 %v2101, %v2165
        %v2198 = vmul.f32 %v2102, %v2166
        %v2199 = vmul.f32 %v2103, %v2167
        %v2200 = vmul.f32 %v2104, %v2168
        %v2201 = vmul.f32 %v2105, %v2169
        %v2202 = vmul.f32 %v2106, %v2170
        %v2203 = vmul.f32 %v2107, %v2171
        %v2204 = vmul.f32 %v2108, %v2172
        %v2205 = vmul.f32 %v2109, %v2173
        %v2206 = vmul.f32 %v2110, %v2174
        %v2207 = vpack.c.bf16 %v2176, %v2175
        %v2208 = vpack.c.bf16 %v2178, %v2177
        %v2209 = vpack.c.bf16 %v2180, %v2179
        %v2210 = vpack.c.bf16 %v2182, %v2181
        %v2211 = vpack.c.bf16 %v2184, %v2183
        %v2212 = vpack.c.bf16 %v2186, %v2185
        %v2213 = vpack.c.bf16 %v2188, %v2187
        %v2214 = vpack.c.bf16 %v2190, %v2189
        %v2215 = vpack.c.bf16 %v2192, %v2191
        %v2216 = vpack.c.bf16 %v2194, %v2193
        %v2217 = vpack.c.bf16 %v2196, %v2195
        %v2218 = vpack.c.bf16 %v2198, %v2197
        %v2219 = vpack.c.bf16 %v2200, %v2199
        %v2220 = vpack.c.bf16 %v2202, %v2201
        %v2221 = vpack.c.bf16 %v2204, %v2203
        %v2222 = vpack.c.bf16 %v2206, %v2205
        %v2239 = vunpack.c.l.b16 %v2207
        %v2240 = vunpack.c.h.b16 %v2207
        %v2241 = vunpack.c.l.b16 %v2208
        %v2242 = vunpack.c.h.b16 %v2208
        %v2243 = vunpack.c.l.b16 %v2209
        %v2244 = vunpack.c.h.b16 %v2209
        %v2245 = vunpack.c.l.b16 %v2210
        %v2246 = vunpack.c.h.b16 %v2210
        %v2247 = vunpack.c.l.b16 %v2211
        %v2248 = vunpack.c.h.b16 %v2211
        %v2249 = vunpack.c.l.b16 %v2212
        %v2250 = vunpack.c.h.b16 %v2212
        %v2251 = vunpack.c.l.b16 %v2213
        %v2252 = vunpack.c.h.b16 %v2213
        %v2253 = vunpack.c.l.b16 %v2214
        %v2254 = vunpack.c.h.b16 %v2214
        %v2255 = vunpack.c.l.b16 %v2215
        %v2256 = vunpack.c.h.b16 %v2215
        %v2257 = vunpack.c.l.b16 %v2216
        %v2258 = vunpack.c.h.b16 %v2216
        %v2259 = vunpack.c.l.b16 %v2217
        %v2260 = vunpack.c.h.b16 %v2217
        %v2261 = vunpack.c.l.b16 %v2218
        %v2262 = vunpack.c.h.b16 %v2218
        %v2263 = vunpack.c.l.b16 %v2219
        %v2264 = vunpack.c.h.b16 %v2219
        %v2265 = vunpack.c.l.b16 %v2220
        %v2266 = vunpack.c.h.b16 %v2220
        %v2267 = vunpack.c.l.b16 %v2221
        %v2268 = vunpack.c.h.b16 %v2221
        %v2269 = vunpack.c.l.b16 %v2222
        %v2270 = vunpack.c.h.b16 %v2222
        %v2271 = vpack.c.b16 %v2239, %v2239
        %v2272 = vpack.c.b16 %v2240, %v2240
        %v2273 = vpack.c.b16 %v2241, %v2241
        %v2274 = vpack.c.b16 %v2242, %v2242
        %v2275 = vpack.c.b16 %v2243, %v2243
        %v2276 = vpack.c.b16 %v2244, %v2244
        %v2277 = vpack.c.b16 %v2245, %v2245
        %v2278 = vpack.c.b16 %v2246, %v2246
        %v2279 = vpack.c.b16 %v2247, %v2247
        %v2280 = vpack.c.b16 %v2248, %v2248
        %v2281 = vpack.c.b16 %v2249, %v2249
        %v2282 = vpack.c.b16 %v2250, %v2250
        %v2283 = vpack.c.b16 %v2251, %v2251
        %v2284 = vpack.c.b16 %v2252, %v2252
        %v2285 = vpack.c.b16 %v2253, %v2253
        %v2286 = vpack.c.b16 %v2254, %v2254
        %v2287 = vpack.c.b16 %v2255, %v2255
        %v2288 = vpack.c.b16 %v2256, %v2256
        %v2289 = vpack.c.b16 %v2257, %v2257
        %v2290 = vpack.c.b16 %v2258, %v2258
        %v2291 = vpack.c.b16 %v2259, %v2259
        %v2292 = vpack.c.b16 %v2260, %v2260
        %v2293 = vpack.c.b16 %v2261, %v2261
        %v2294 = vpack.c.b16 %v2262, %v2262
        %v2295 = vpack.c.b16 %v2263, %v2263
        %v2296 = vpack.c.b16 %v2264, %v2264
        %v2297 = vpack.c.b16 %v2265, %v2265
        %v2298 = vpack.c.b16 %v2266, %v2266
        %v2299 = vpack.c.b16 %v2267, %v2267
        %v2300 = vpack.c.b16 %v2268, %v2268
        %v2301 = vpack.c.b16 %v2269, %v2269
        %v2302 = vpack.c.b16 %v2270, %v2270
        %2335 = vst [vmem:[%s244] sm:$0xf] %v2271
        %2336 = vst [vmem:[%s244 + $0x4] sm:$0xf] %v2272
        %2337 = vst [vmem:[%s244 + $0x8] sm:$0xf] %v2273
        %2338 = vst [vmem:[%s244 + $0xc] sm:$0xf] %v2274
        %2339 = vst [vmem:[%s244 + $0x10] sm:$0xf] %v2275
        %2340 = vst [vmem:[%s244 + $0x14] sm:$0xf] %v2276
        %2341 = vst [vmem:[%s244 + $0x18] sm:$0xf] %v2277
        %2342 = vst [vmem:[%s244 + $0x1c] sm:$0xf] %v2278
        %2343 = vst [vmem:[%s244 + $0x20] sm:$0xf] %v2279
        %2344 = vst [vmem:[%s244 + $0x24] sm:$0xf] %v2280
        %2345 = vst [vmem:[%s244 + $0x28] sm:$0xf] %v2281
        %2346 = vst [vmem:[%s244 + $0x2c] sm:$0xf] %v2282
        %2347 = vst [vmem:[%s244 + $0x30] sm:$0xf] %v2283
        %2348 = vst [vmem:[%s244 + $0x34] sm:$0xf] %v2284
        %2349 = vst [vmem:[%s244 + $0x38] sm:$0xf] %v2285
        %2350 = vst [vmem:[%s244 + $0x3c] sm:$0xf] %v2286
        %2351 = vst [vmem:[%s244 + $0x40] sm:$0xf] %v2287
        %2352 = vst [vmem:[%s244 + $0x44] sm:$0xf] %v2288
        %2353 = vst [vmem:[%s244 + $0x48] sm:$0xf] %v2289
        %2354 = vst [vmem:[%s244 + $0x4c] sm:$0xf] %v2290
        %2355 = vst [vmem:[%s244 + $0x50] sm:$0xf] %v2291
        %2356 = vst [vmem:[%s244 + $0x54] sm:$0xf] %v2292
        %2357 = vst [vmem:[%s244 + $0x58] sm:$0xf] %v2293
        %2358 = vst [vmem:[%s244 + $0x5c] sm:$0xf] %v2294
        %2359 = vst [vmem:[%s244 + $0x60] sm:$0xf] %v2295
        %2360 = vst [vmem:[%s244 + $0x64] sm:$0xf] %v2296
        %2361 = vst [vmem:[%s244 + $0x68] sm:$0xf] %v2297
        %2362 = vst [vmem:[%s244 + $0x6c] sm:$0xf] %v2298
        %2363 = vst [vmem:[%s244 + $0x70] sm:$0xf] %v2299
        %2364 = vst [vmem:[%s244 + $0x74] sm:$0xf] %v2300
        %2365 = vst [vmem:[%s244 + $0x78] sm:$0xf] %v2301
        %2366 = vst [vmem:[%s244 + $0x7c] sm:$0xf] %v2302
        %s2367 = sand.u32 %s119, 1
        %s2368 = scalar_lea.sflag [#allocation4], %s2367
        %s2369 = sand.u32 %s119, 1
        %s2370 = smul.addr %s2369, 128
        %s2371 = scalar_lea.vmem [#allocation8], %s2370
        // Predicated region
        $region49: #{tpu_custom_call.1} parent=35 // pred_check
          %p2372 = pneg %p129
        $region50: #{tpu_custom_call.1} parent=35 // pred_check_branch
          %2374 = sbr.rel (%p2372) target = $region52
        $region51: #{tpu_custom_call.1} parent=35 // pred_region
          %s2375 = smul.u32 32, %s22
          %s2377 = ssub.s32 2048, 2048
          %2378 = vsyncadd %s2368, %s2377
          %s2379 = smul.addr %s2375, 64
          %s2380 = scalar_lea.hbm %s4, %s2379
          %s2381 = sshll.u32 %s2371, 4
          %s2382 = int_to_ptr.vmem [resolvable:$true] %s2381
          %2387 = dma.vmem_to_hbm [thread:$0]  %s2382, 2048, %s2380, %s2368, 64, 64, 4
        $region52: #{tpu_custom_call.1} parent=35 // pred_fallthru
          _
      $region36: #{tpu_custom_call.1} parent=5 // pred_fallthru
        _
      %p2388 = scmp.le.s32.totalorder 2, %s17
      // Predicated region
      $region53: #{tpu_custom_call.1} parent=5 // pred_check
        %p2389 = pneg %p2388
      $region54: #{tpu_custom_call.1} parent=5 // pred_check_branch
        %2391 = sbr.rel (%p2389) target = $region56
      $region55: #{tpu_custom_call.1} parent=5 // pred_region
        %s2392 = ssub.s32 %s17, 2
        // Predicated region
        $region57: #{tpu_custom_call.1} parent=55 // pred_check
          %p2393 = pneg %p135
        $region58: #{tpu_custom_call.1} parent=55 // pred_check_branch
          %2395 = sbr.rel (%p2393) target = $region60
        $region59: #{tpu_custom_call.1} parent=55 // pred_region
          %s2396 = sand.u32 %s120, 1
          %s2397 = scalar_lea.sflag [#allocation4], %s2396
          %s2398 = sand.u32 %s120, 1
          %s2399 = smul.addr %s2398, 128
          %s2400 = scalar_lea.vmem [#allocation8], %s2399
          %2401 = dma.done %s2397, 2048
        $region60: #{tpu_custom_call.1} parent=55 // pred_fallthru
          _
      $region56: #{tpu_custom_call.1} parent=5 // pred_fallthru
        _
    $region6: #{tpu_custom_call.1} parent=1 // loop_footer
      %s21 = sadd.s32 1, %s17
    $region7: #{tpu_custom_call.1} parent=1 // loop_footer_branch
      %16 = sbr.rel target = $region3
    $region8: #{tpu_custom_call.1} parent=1 // loop_exit
      _
    %2402 = vsyncpa [#allocation3], 1
    %s2403 = scalar_lea.sflag [#allocation3], 1
    %2404 = vsyncpa %s2403, 1
    %2405 = vsyncpa [#allocation6], 1
    %2406 = vsyncpa [#allocation4], 1
    %s2407 = scalar_lea.sflag [#allocation4], 1
    %2408 = vsyncpa %s2407, 1

</llo_original>
